<compile_context>
chip_gen: v6e
topology: v6e:2x2x1
jax: 0.10.0
libtpu: 0.0.40
codegen_flags: <defaults>
</compile_context>

<pallas_src>
import functools

import jax
import jax.numpy as jnp
from jax.experimental import pallas as pl
from jax.experimental.pallas import tpu as pltpu

NEG_SLOPE = 0.01  # PyTorch F.leaky_relu default
LANE = 128
SUBLANE = 8


def _round_up(n, m):
    return ((n + m - 1) // m) * m


def _choose_tb(batch, tb_max=512):
    """Pick a batch tile: minimize padding, prefer >=2 grid steps, then larger TB."""
    bs = _round_up(max(batch, 1), SUBLANE)
    candidates = [t for t in (512, 256, 128, 64, 32, 16, 8) if t <= max(tb_max, 8)]

    def key(t):
        bp = _round_up(bs, t)
        pad = bp - bs
        single_step = (bp // t) < 2
        return (pad, single_step, -t)

    tb = min(candidates, key=key)
    return tb, _round_up(bs, tb)


def _vmem_limit_bytes(w_args, tb, in_feats, out_feats, hidden_max):
    resident = sum(int(a.size) * a.dtype.itemsize for a in w_args)  # Buffered(1)
    io = 2 * sum(tb * f * 2 for f in in_feats)       # bf16 inputs, double-buffered
    io += 2 * sum(tb * f * 4 for f in out_feats)     # f32 outputs, double-buffered
    scratch = 4 * tb * hidden_max * 4                # f32 accumulators headroom
    need = resident + io + scratch
    return int(min(64 << 20, max((need * 5) // 4 + (2 << 20), 16 << 20)))


# ---------------------------------------------------------------------------
# Kernel bodies
# ---------------------------------------------------------------------------
def _layer(h_bf16, w_ref, b_ref):
    """bf16 matmul (f32 acc) + f32 bias-add + f32 leaky-ReLU -> bf16 activation."""
    acc = jnp.dot(h_bf16, w_ref[...], preferred_element_type=jnp.float32)
    acc = acc + b_ref[...]
    acc = jnp.where(acc > 0, acc, NEG_SLOPE * acc)
    return acc.astype(jnp.bfloat16)


def _final(h_bf16, w_ref, b_ref):
    """Last Fd layer: no activation, f32 result."""
    return jnp.dot(h_bf16, w_ref[...], preferred_element_type=jnp.float32) + b_ref[...]


def _c2ae_train_kernel(x_ref, y_ref,
                       wx1, bx1, wx2, bx2, wx3, bx3,
                       we1, be1, we2, be2,
                       wd1, bd1, wd2, bd2,
                       fx_out, fe_out, fd_out):
    # ---- Fx(x): 3 layers, leaky_relu after every layer ---------------------
    h = _layer(x_ref[...], wx1, bx1)
    h = _layer(h, wx2, bx2)
    fx = _layer(h, wx3, bx3)
    fx_out[...] = fx.astype(fx_out.dtype)

    # ---- Fe(y): 2 layers, leaky_relu after every layer ---------------------
    he = _layer(y_ref[...], we1, be1)
    fe = _layer(he, we2, be2)
    fe_out[...] = fe.astype(fe_out.dtype)

    # ---- Fd(Fe(y)): leaky_relu on hidden, no final activation --------------
    hd = _layer(fe, wd1, bd1)
    fd_out[...] = _final(hd, wd2, bd2).astype(fd_out.dtype)


def _c2ae_predict_kernel(x_ref,
                         wx1, bx1, wx2, bx2, wx3, bx3,
                         wd1, bd1, wd2, bd2,
                         out_ref):
    h = _layer(x_ref[...], wx1, bx1)
    h = _layer(h, wx2, bx2)
    fx = _layer(h, wx3, bx3)
    hd = _layer(fx, wd1, bd1)
    out_ref[...] = _final(hd, wd2, bd2).astype(out_ref.dtype)


# ---------------------------------------------------------------------------
# BlockSpecs
# ---------------------------------------------------------------------------
def _act_spec(tb, feat):
    return pl.BlockSpec((tb, feat), lambda i: (i, 0))


def _resident_spec(arr):
    # Constant block index -> the block stays VMEM-resident across grid steps.
    # Buffered(1): never re-fetched, so double-buffering would be pure VMEM waste.
    return pl.BlockSpec(arr.shape, lambda i: (0, 0), pipeline_mode=pl.Buffered(1))


def _prep_input(a, batch_pad, feat_padded):
    a = a.astype(jnp.bfloat16)
    feat_pad = feat_padded - a.shape[1]
    if batch_pad or feat_pad:
        a = jnp.pad(a, ((0, batch_pad), (0, feat_pad)))
    return a


# ---------------------------------------------------------------------------
# Wrappers: batch-gridded pallas_call with resident (constant-block) weights.
# ---------------------------------------------------------------------------
@functools.partial(jax.jit,
                   static_argnames=("latent_dim", "n_labels", "tb", "core_parallel"))
def c2ae_forward_train(x, y, params, *, latent_dim, n_labels, tb=None,
                       core_parallel=False):
    """Training-mode forward: returns (Fx(x), Fe(y), Fd(Fe(y)))."""
    B = x.shape[0]
    in_p = params["wx1"].shape[0]
    hx1_p = params["wx1"].shape[1]
    hx2_p = params["wx2"].shape[1]
    lat_p = params["wx3"].shape[1]
    lab_p = params["we1"].shape[0]
    he_p = params["we1"].shape[1]
    hd_p = params["wd1"].shape[1]

    if tb is None:
        TB, Bp = _choose_tb(B)
    else:
        TB = _round_up(min(tb, _round_up(B, SUBLANE)), SUBLANE)
        Bp = _round_up(B, TB)

    xp = _prep_input(x, Bp - B, in_p)
    yp = _prep_input(y, Bp - B, lab_p)

    w_names = ("wx1", "bx1", "wx2", "bx2", "wx3", "bx3",
               "we1", "be1", "we2", "be2",
               "wd1", "bd1", "wd2", "bd2")
    w_args = tuple(params[n] for n in w_names)

    flops = 2 * Bp * (in_p * hx1_p + hx1_p * hx2_p + hx2_p * lat_p +
                      lab_p * he_p + he_p * lat_p +
                      lat_p * hd_p + hd_p * lab_p)
    bytes_acc = (xp.size + yp.size) * 2 \
        + sum(a.size * a.dtype.itemsize for a in w_args) \
        + Bp * (2 * lat_p + lab_p) * 4

    hidden_max = max(hx1_p, hx2_p, he_p, hd_p, lat_p, lab_p)
    vmem_limit = _vmem_limit_bytes(w_args, TB, (in_p, lab_p),
                                   (lat_p, lat_p, lab_p), hidden_max)

    # NOTE: outputs are kept f32 so the latent/corr losses see full precision;
    # switch to bf16 here if the downstream loss tolerates it.
    out_shape = (jax.ShapeDtypeStruct((Bp, lat_p), jnp.float32),   # Fx(x)
                 jax.ShapeDtypeStruct((Bp, lat_p), jnp.float32),   # Fe(y)
                 jax.ShapeDtypeStruct((Bp, lab_p), jnp.float32))   # Fd(Fe(y))

    sem = pltpu.CORE_PARALLEL if core_parallel else "parallel"

    fx_p, fe_p, fd_p = pl.pallas_call(
        _c2ae_train_kernel,
        out_shape=out_shape,
        grid=(Bp // TB,),
        in_specs=[_act_spec(TB, in_p), _act_spec(TB, lab_p)]
                 + [_resident_spec(a) for a in w_args],
        out_specs=(_act_spec(TB, lat_p), _act_spec(TB, lat_p),
                   _act_spec(TB, lab_p)),
        compiler_params=pltpu.CompilerParams(
            dimension_semantics=(sem,),
            vmem_limit_bytes=vmem_limit),
        cost_estimate=pl.CostEstimate(flops=int(flops), transcendentals=0,
                                      bytes_accessed=int(bytes_acc)),
    )(xp, yp, *w_args)

    return (fx_p[:B, :latent_dim], fe_p[:B, :latent_dim], fd_p[:B, :n_labels])


@functools.partial(jax.jit, static_argnames=("n_labels", "tb", "core_parallel"))
def c2ae_predict(x, params, *, n_labels, tb=None, core_parallel=False):
    """Eval-mode forward: Fd(Fx(x))."""
    B = x.shape[0]
    in_p = params["wx1"].shape[0]
    hx1_p = params["wx1"].shape[1]
    hx2_p = params["wx2"].shape[1]
    lat_p = params["wx3"].shape[1]
    hd_p = params["wd1"].shape[1]
    lab_p = params["wd2"].shape[1]

    if tb is None:
        TB, Bp = _choose_tb(B)
    else:
        TB = _round_up(min(tb, _round_up(B, SUBLANE)), SUBLANE)
        Bp = _round_up(B, TB)

    xp = _prep_input(x, Bp - B, in_p)

    w_names = ("wx1", "bx1", "wx2", "bx2", "wx3", "bx3",
               "wd1", "bd1", "wd2", "bd2")
    w_args = tuple(params[n] for n in w_names)

    flops = 2 * Bp * (in_p * hx1_p + hx1_p * hx2_p + hx2_p * lat_p +
                      lat_p * hd_p + hd_p * lab_p)
    bytes_acc = xp.size * 2 \
        + sum(a.size * a.dtype.itemsize for a in w_args) \
        + Bp * lab_p * 4

    hidden_max = max(hx1_p, hx2_p, hd_p, lat_p, lab_p)
    vmem_limit = _vmem_limit_bytes(w_args, TB, (in_p,), (lab_p,), hidden_max)

    sem = pltpu.CORE_PARALLEL if core_parallel else "parallel"

    out_p = pl.pallas_call(
        _c2ae_predict_kernel,
        out_shape=jax.ShapeDtypeStruct((Bp, lab_p), jnp.float32),
        grid=(Bp // TB,),
        in_specs=[_act_spec(TB, in_p)] + [_resident_spec(a) for a in w_args],
        out_specs=_act_spec(TB, lab_p),
        compiler_params=pltpu.CompilerParams(
            dimension_semantics=(sem,),
            vmem_limit_bytes=vmem_limit),
        cost_estimate=pl.CostEstimate(flops=int(flops), transcendentals=0,
                                      bytes_accessed=int(bytes_acc)),
    )(xp, *w_args)

    return out_p[:B, :n_labels]


# ---------------------------------------------------------------------------
# Parameter init (PyTorch nn.Linear default: U(-1/sqrt(in), +1/sqrt(in))),
# stored pre-transposed as [in, out]; biases as [1, out] rows.
# ---------------------------------------------------------------------------
def init_params(key, in_dim, n_labels, latent_dim, hx1, hx2, he, hd):
    def linear(k, fan_in, fan_out):
        kw, kb = jax.random.split(k)
        bound = 1.0 / (fan_in ** 0.5)
        w = jax.random.uniform(kw, (fan_in, fan_out), jnp.float32, -bound, bound)
        b = jax.random.uniform(kb, (1, fan_out), jnp.float32, -bound, bound)
        return w, b

    keys = jax.random.split(key, 7)
    p = {}
    p["wx1"], p["bx1"] = linear(keys[0], in_dim, hx1)        # Fx
    p["wx2"], p["bx2"] = linear(keys[1], hx1, hx2)
    p["wx3"], p["bx3"] = linear(keys[2], hx2, latent_dim)
    p["we1"], p["be1"] = linear(keys[3], n_labels, he)       # Fe
    p["we2"], p["be2"] = linear(keys[4], he, latent_dim)
    p["wd1"], p["bd1"] = linear(keys[5], latent_dim, hd)     # Fd (fin_act=None)
    p["wd2"], p["bd2"] = linear(keys[6], hd, n_labels)
    return p


def pad_params(p):
    """Zero-pad every dim to a multiple of 128; weights -> bf16, biases -> f32."""
    out = {}
    for k, v in p.items():
        if k.startswith("w"):
            kp = _round_up(v.shape[0], LANE)
            np_ = _round_up(v.shape[1], LANE)
            out[k] = jnp.pad(v, ((0, kp - v.shape[0]),
                                 (0, np_ - v.shape[1]))).astype(jnp.bfloat16)
        else:
            np_ = _round_up(v.shape[1], LANE)
            out[k] = jnp.pad(v, ((0, 0),
                                 (0, np_ - v.shape[1]))).astype(jnp.float32)
    return out


def pad_features(a, feat_padded):
    """One-time (outside jit) feature pad + bf16 cast of an input batch."""
    a = a.astype(jnp.bfloat16)
    return jnp.pad(a, ((0, 0), (0, feat_padded - a.shape[1])))


# ---------------------------------------------------------------------------
# Pure-JAX reference (same padded bf16 weights / bf16 activations / f32 acc).
# ---------------------------------------------------------------------------
def _ref_layer(h, w, b):
    acc = jnp.dot(h, w, preferred_element_type=jnp.float32) + b
    acc = jnp.where(acc > 0, acc, NEG_SLOPE * acc)
    return acc.astype(jnp.bfloat16)


def _ref_final(h, w, b):
    return jnp.dot(h, w, preferred_element_type=jnp.float32) + b


def _ref_forward_train(xp, yp, p, latent_dim, n_labels):
    h = _ref_layer(xp, p["wx1"], p["bx1"])
    h = _ref_layer(h, p["wx2"], p["bx2"])
    fx = _ref_layer(h, p["wx3"], p["bx3"])
    he = _ref_layer(yp, p["we1"], p["be1"])
    fe = _ref_layer(he, p["we2"], p["be2"])
    hd = _ref_layer(fe, p["wd1"], p["bd1"])
    fd = _ref_final(hd, p["wd2"], p["bd2"])
    return (fx.astype(jnp.float32)[:, :latent_dim],
            fe.astype(jnp.float32)[:, :latent_dim],
            fd[:, :n_labels])


def _ref_predict(xp, p, n_labels):
    h = _ref_layer(xp, p["wx1"], p["bx1"])
    h = _ref_layer(h, p["wx2"], p["bx2"])
    fx = _ref_layer(h, p["wx3"], p["bx3"])
    hd = _ref_layer(fx, p["wd1"], p["bd1"])
    fd = _ref_final(hd, p["wd2"], p["bd2"])
    return fd[:, :n_labels]


if __name__ == "__main__":
    # Small, module-consistent shapes (scaled-down Fx 512/256, Fe 512, Fd 256).
    B = 24         # batch -> adaptive TB=8 -> grid of 3 steps (exercises pipeline)
    IN_DIM = 32    # Fx in_dim
    N_LABELS = 10  # Fe in_dim / Fd out_dim
    LATENT = 16    # latent_dim
    HX1, HX2 = 64, 64
    HE, HD = 64, 64

    key = jax.random.PRNGKey(0)
    kx, ky, kp = jax.random.split(key, 3)
    x = jax.random.normal(kx, (B, IN_DIM), jnp.float32)
    # multi-label targets in {0,1}, fed to Fe as floats (as in the PyTorch model)
    y = jax.random.bernoulli(ky, 0.3, (B, N_LABELS)).astype(jnp.float32)

    raw = init_params(kp, IN_DIM, N_LABELS, LATENT, HX1, HX2, HE, HD)
    params = pad_params(raw)

    # Feature-pad + bf16-cast the inputs ONCE, outside the jitted wrappers
    # (only the cheap batch pad, if any, remains per call).
    xp = pad_features(x, params["wx1"].shape[0])
    yp = pad_features(y, params["we1"].shape[0])

    # Training-mode forward (module forward with self.training=True).
    fx_x, fe_y, fd_z = jax.block_until_ready(
        c2ae_forward_train(xp, yp, params, latent_dim=LATENT, n_labels=N_LABELS))
    # Eval-mode forward (predict path).
    preds = jax.block_until_ready(
        c2ae_predict(xp, params, n_labels=N_LABELS))

    # Sanity check against a pure-JAX reference using the identical bf16 math.
    rfx, rfe, rfd = _ref_forward_train(xp, yp, params, LATENT, N_LABELS)
    rpred = _ref_predict(xp, params, N_LABELS)
    assert fx_x.shape == (B, LATENT) and fe_y.shape == (B, LATENT)
    assert fd_z.shape == (B, N_LABELS) and preds.shape == (B, N_LABELS)
    assert jnp.allclose(fx_x, rfx, atol=2e-2, rtol=2e-2)
    assert jnp.allclose(fe_y, rfe, atol=2e-2, rtol=2e-2)
    assert jnp.allclose(fd_z, rfd, atol=2e-2, rtol=2e-2)
    assert jnp.allclose(preds, rpred, atol=2e-2, rtol=2e-2)

    # TODO(synk): latent_loss / corr_loss are training-loss utilities (not part
    # of the module's forward pass); they are not implemented as kernels here.
    print("KERNEL_OK")
</pallas_src>

<mosaic_0001>
module attributes {stable_mosaic.version = 11 : i64} {
  func.func @_c2ae_train_kernel(%arg0: i32, %arg1: memref<8x128xbf16, #tpu.memory_space<vmem>>, %arg2: memref<8x128xbf16, #tpu.memory_space<vmem>>, %arg3: memref<128x128xbf16, #tpu.memory_space<vmem>>, %arg4: memref<1x128xf32, #tpu.memory_space<vmem>>, %arg5: memref<128x128xbf16, #tpu.memory_space<vmem>>, %arg6: memref<1x128xf32, #tpu.memory_space<vmem>>, %arg7: memref<128x128xbf16, #tpu.memory_space<vmem>>, %arg8: memref<1x128xf32, #tpu.memory_space<vmem>>, %arg9: memref<128x128xbf16, #tpu.memory_space<vmem>>, %arg10: memref<1x128xf32, #tpu.memory_space<vmem>>, %arg11: memref<128x128xbf16, #tpu.memory_space<vmem>>, %arg12: memref<1x128xf32, #tpu.memory_space<vmem>>, %arg13: memref<128x128xbf16, #tpu.memory_space<vmem>>, %arg14: memref<1x128xf32, #tpu.memory_space<vmem>>, %arg15: memref<128x128xbf16, #tpu.memory_space<vmem>>, %arg16: memref<1x128xf32, #tpu.memory_space<vmem>>, %arg17: memref<8x128xf32, #tpu.memory_space<vmem>>, %arg18: memref<8x128xf32, #tpu.memory_space<vmem>>, %arg19: memref<8x128xf32, #tpu.memory_space<vmem>>) attributes {dimension_semantics = [#tpu.dimension_semantics<parallel>], iteration_bounds = array<i64: 3>, scalar_prefetch = 0 : i64, scratch_operands = 0 : i64, tpu.core_type = #tpu.core_type<tc>, window_params = [{transform_indices = @transform_0, window_bounds = array<i64: 8, 128>}, {transform_indices = @transform_1, window_bounds = array<i64: 8, 128>}, {pipeline_mode = #tpu.pipeline_mode<synchronous>, transform_indices = @transform_2, window_bounds = array<i64: 128, 128>}, {pipeline_mode = #tpu.pipeline_mode<synchronous>, transform_indices = @transform_3, window_bounds = array<i64: 1, 128>}, {pipeline_mode = #tpu.pipeline_mode<synchronous>, transform_indices = @transform_4, window_bounds = array<i64: 128, 128>}, {pipeline_mode = #tpu.pipeline_mode<synchronous>, transform_indices = @transform_5, window_bounds = array<i64: 1, 128>}, {pipeline_mode = #tpu.pipeline_mode<synchronous>, transform_indices = @transform_6, window_bounds = array<i64: 128, 128>}, {pipeline_mode = #tpu.pipeline_mode<synchronous>, transform_indices = @transform_7, window_bounds = array<i64: 1, 128>}, {pipeline_mode = #tpu.pipeline_mode<synchronous>, transform_indices = @transform_8, window_bounds = array<i64: 128, 128>}, {pipeline_mode = #tpu.pipeline_mode<synchronous>, transform_indices = @transform_9, window_bounds = array<i64: 1, 128>}, {pipeline_mode = #tpu.pipeline_mode<synchronous>, transform_indices = @transform_10, window_bounds = array<i64: 128, 128>}, {pipeline_mode = #tpu.pipeline_mode<synchronous>, transform_indices = @transform_11, window_bounds = array<i64: 1, 128>}, {pipeline_mode = #tpu.pipeline_mode<synchronous>, transform_indices = @transform_12, window_bounds = array<i64: 128, 128>}, {pipeline_mode = #tpu.pipeline_mode<synchronous>, transform_indices = @transform_13, window_bounds = array<i64: 1, 128>}, {pipeline_mode = #tpu.pipeline_mode<synchronous>, transform_indices = @transform_14, window_bounds = array<i64: 128, 128>}, {pipeline_mode = #tpu.pipeline_mode<synchronous>, transform_indices = @transform_15, window_bounds = array<i64: 1, 128>}, {transform_indices = @transform_16, window_bounds = array<i64: 8, 128>}, {transform_indices = @transform_17, window_bounds = array<i64: 8, 128>}, {transform_indices = @transform_18, window_bounds = array<i64: 8, 128>}]} {
    %c0 = arith.constant 0 : index
    %c0_0 = arith.constant 0 : index
    %0 = vector.load %arg1[%c0, %c0_0] : memref<8x128xbf16, #tpu.memory_space<vmem>>, vector<8x128xbf16>
    %c0_1 = arith.constant 0 : index
    %c0_2 = arith.constant 0 : index
    %1 = vector.load %arg3[%c0_1, %c0_2] : memref<128x128xbf16, #tpu.memory_space<vmem>>, vector<128x128xbf16>
    %cst = arith.constant dense<0.000000e+00> : vector<8x128xf32>
    %2 = tpu.matmul %0, %1, %cst {dimension_numbers = #tpu.dot_dimension_numbers<[1], [0], [0], [1], [0, 0, 1, 1], [], []>} : vector<8x128xbf16>, vector<128x128xbf16>, vector<8x128xf32> -> vector<8x128xf32>
    %c0_3 = arith.constant 0 : index
    %c0_4 = arith.constant 0 : index
    %3 = vector.load %arg4[%c0_3, %c0_4] : memref<1x128xf32, #tpu.memory_space<vmem>>, vector<1x128xf32>
    %4 = vector.broadcast %3 : vector<1x128xf32> to vector<8x128xf32>
    %5 = arith.addf %2, %4 : vector<8x128xf32>
    %cst_5 = arith.constant 0.000000e+00 : f32
    %6 = vector.broadcast %cst_5 : f32 to vector<8x128xf32>
    %7 = arith.cmpf ogt, %5, %6 : vector<8x128xf32>
    %cst_6 = arith.constant 0.00999999977 : f32
    %8 = vector.broadcast %cst_6 : f32 to vector<8x128xf32>
    %9 = arith.mulf %8, %5 : vector<8x128xf32>
    %10 = arith.select %7, %5, %9 : vector<8x128xi1>, vector<8x128xf32>
    %11 = arith.truncf %10 : vector<8x128xf32> to vector<8x128xbf16>
    %c0_7 = arith.constant 0 : index
    %c0_8 = arith.constant 0 : index
    %12 = vector.load %arg5[%c0_7, %c0_8] : memref<128x128xbf16, #tpu.memory_space<vmem>>, vector<128x128xbf16>
    %cst_9 = arith.constant dense<0.000000e+00> : vector<8x128xf32>
    %13 = tpu.matmul %11, %12, %cst_9 {dimension_numbers = #tpu.dot_dimension_numbers<[1], [0], [0], [1], [0, 0, 1, 1], [], []>} : vector<8x128xbf16>, vector<128x128xbf16>, vector<8x128xf32> -> vector<8x128xf32>
    %c0_10 = arith.constant 0 : index
    %c0_11 = arith.constant 0 : index
    %14 = vector.load %arg6[%c0_10, %c0_11] : memref<1x128xf32, #tpu.memory_space<vmem>>, vector<1x128xf32>
    %15 = vector.broadcast %14 : vector<1x128xf32> to vector<8x128xf32>
    %16 = arith.addf %13, %15 : vector<8x128xf32>
    %cst_12 = arith.constant 0.000000e+00 : f32
    %17 = vector.broadcast %cst_12 : f32 to vector<8x128xf32>
    %18 = arith.cmpf ogt, %16, %17 : vector<8x128xf32>
    %cst_13 = arith.constant 0.00999999977 : f32
    %19 = vector.broadcast %cst_13 : f32 to vector<8x128xf32>
    %20 = arith.mulf %19, %16 : vector<8x128xf32>
    %21 = arith.select %18, %16, %20 : vector<8x128xi1>, vector<8x128xf32>
    %22 = arith.truncf %21 : vector<8x128xf32> to vector<8x128xbf16>
    %c0_14 = arith.constant 0 : index
    %c0_15 = arith.constant 0 : index
    %23 = vector.load %arg7[%c0_14, %c0_15] : memref<128x128xbf16, #tpu.memory_space<vmem>>, vector<128x128xbf16>
    %cst_16 = arith.constant dense<0.000000e+00> : vector<8x128xf32>
    %24 = tpu.matmul %22, %23, %cst_16 {dimension_numbers = #tpu.dot_dimension_numbers<[1], [0], [0], [1], [0, 0, 1, 1], [], []>} : vector<8x128xbf16>, vector<128x128xbf16>, vector<8x128xf32> -> vector<8x128xf32>
    %c0_17 = arith.constant 0 : index
    %c0_18 = arith.constant 0 : index
    %25 = vector.load %arg8[%c0_17, %c0_18] : memref<1x128xf32, #tpu.memory_space<vmem>>, vector<1x128xf32>
    %26 = vector.broadcast %25 : vector<1x128xf32> to vector<8x128xf32>
    %27 = arith.addf %24, %26 : vector<8x128xf32>
    %cst_19 = arith.constant 0.000000e+00 : f32
    %28 = vector.broadcast %cst_19 : f32 to vector<8x128xf32>
    %29 = arith.cmpf ogt, %27, %28 : vector<8x128xf32>
    %cst_20 = arith.constant 0.00999999977 : f32
    %30 = vector.broadcast %cst_20 : f32 to vector<8x128xf32>
    %31 = arith.mulf %30, %27 : vector<8x128xf32>
    %32 = arith.select %29, %27, %31 : vector<8x128xi1>, vector<8x128xf32>
    %33 = arith.truncf %32 : vector<8x128xf32> to vector<8x128xbf16>
    %34 = arith.extf %33 : vector<8x128xbf16> to vector<8x128xf32>
    %c0_21 = arith.constant 0 : index
    %c0_22 = arith.constant 0 : index
    %35 = vector.load %arg17[%c0_21, %c0_22] : memref<8x128xf32, #tpu.memory_space<vmem>>, vector<8x128xf32>
    tpu.vector_store %arg17[%c0_21, %c0_22], %34 {strides = array<i32>} : memref<8x128xf32, #tpu.memory_space<vmem>>, vector<8x128xf32>,
    %c0_23 = arith.constant 0 : index
    %c0_24 = arith.constant 0 : index
    %36 = vector.load %arg2[%c0_23, %c0_24] : memref<8x128xbf16, #tpu.memory_space<vmem>>, vector<8x128xbf16>
    %c0_25 = arith.constant 0 : index
    %c0_26 = arith.constant 0 : index
    %37 = vector.load %arg9[%c0_25, %c0_26] : memref<128x128xbf16, #tpu.memory_space<vmem>>, vector<128x128xbf16>
    %cst_27 = arith.constant dense<0.000000e+00> : vector<8x128xf32>
    %38 = tpu.matmul %36, %37, %cst_27 {dimension_numbers = #tpu.dot_dimension_numbers<[1], [0], [0], [1], [0, 0, 1, 1], [], []>} : vector<8x128xbf16>, vector<128x128xbf16>, vector<8x128xf32> -> vector<8x128xf32>
    %c0_28 = arith.constant 0 : index
    %c0_29 = arith.constant 0 : index
    %39 = vector.load %arg10[%c0_28, %c0_29] : memref<1x128xf32, #tpu.memory_space<vmem>>, vector<1x128xf32>
    %40 = vector.broadcast %39 : vector<1x128xf32> to vector<8x128xf32>
    %41 = arith.addf %38, %40 : vector<8x128xf32>
    %cst_30 = arith.constant 0.000000e+00 : f32
    %42 = vector.broadcast %cst_30 : f32 to vector<8x128xf32>
    %43 = arith.cmpf ogt, %41, %42 : vector<8x128xf32>
    %cst_31 = arith.constant 0.00999999977 : f32
    %44 = vector.broadcast %cst_31 : f32 to vector<8x128xf32>
    %45 = arith.mulf %44, %41 : vector<8x128xf32>
    %46 = arith.select %43, %41, %45 : vector<8x128xi1>, vector<8x128xf32>
    %47 = arith.truncf %46 : vector<8x128xf32> to vector<8x128xbf16>
    %c0_32 = arith.constant 0 : index
    %c0_33 = arith.constant 0 : index
    %48 = vector.load %arg11[%c0_32, %c0_33] : memref<128x128xbf16, #tpu.memory_space<vmem>>, vector<128x128xbf16>
    %cst_34 = arith.constant dense<0.000000e+00> : vector<8x128xf32>
    %49 = tpu.matmul %47, %48, %cst_34 {dimension_numbers = #tpu.dot_dimension_numbers<[1], [0], [0], [1], [0, 0, 1, 1], [], []>} : vector<8x128xbf16>, vector<128x128xbf16>, vector<8x128xf32> -> vector<8x128xf32>
    %c0_35 = arith.constant 0 : index
    %c0_36 = arith.constant 0 : index
    %50 = vector.load %arg12[%c0_35, %c0_36] : memref<1x128xf32, #tpu.memory_space<vmem>>, vector<1x128xf32>
    %51 = vector.broadcast %50 : vector<1x128xf32> to vector<8x128xf32>
    %52 = arith.addf %49, %51 : vector<8x128xf32>
    %cst_37 = arith.constant 0.000000e+00 : f32
    %53 = vector.broadcast %cst_37 : f32 to vector<8x128xf32>
    %54 = arith.cmpf ogt, %52, %53 : vector<8x128xf32>
    %cst_38 = arith.constant 0.00999999977 : f32
    %55 = vector.broadcast %cst_38 : f32 to vector<8x128xf32>
    %56 = arith.mulf %55, %52 : vector<8x128xf32>
    %57 = arith.select %54, %52, %56 : vector<8x128xi1>, vector<8x128xf32>
    %58 = arith.truncf %57 : vector<8x128xf32> to vector<8x128xbf16>
    %59 = arith.extf %58 : vector<8x128xbf16> to vector<8x128xf32>
    %c0_39 = arith.constant 0 : index
    %c0_40 = arith.constant 0 : index
    %60 = vector.load %arg18[%c0_39, %c0_40] : memref<8x128xf32, #tpu.memory_space<vmem>>, vector<8x128xf32>
    tpu.vector_store %arg18[%c0_39, %c0_40], %59 {strides = array<i32>} : memref<8x128xf32, #tpu.memory_space<vmem>>, vector<8x128xf32>,
    %c0_41 = arith.constant 0 : index
    %c0_42 = arith.constant 0 : index
    %61 = vector.load %arg13[%c0_41, %c0_42] : memref<128x128xbf16, #tpu.memory_space<vmem>>, vector<128x128xbf16>
    %cst_43 = arith.constant dense<0.000000e+00> : vector<8x128xf32>
    %62 = tpu.matmul %58, %61, %cst_43 {dimension_numbers = #tpu.dot_dimension_numbers<[1], [0], [0], [1], [0, 0, 1, 1], [], []>} : vector<8x128xbf16>, vector<128x128xbf16>, vector<8x128xf32> -> vector<8x128xf32>
    %c0_44 = arith.constant 0 : index
    %c0_45 = arith.constant 0 : index
    %63 = vector.load %arg14[%c0_44, %c0_45] : memref<1x128xf32, #tpu.memory_space<vmem>>, vector<1x128xf32>
    %64 = vector.broadcast %63 : vector<1x128xf32> to vector<8x128xf32>
    %65 = arith.addf %62, %64 : vector<8x128xf32>
    %cst_46 = arith.constant 0.000000e+00 : f32
    %66 = vector.broadcast %cst_46 : f32 to vector<8x128xf32>
    %67 = arith.cmpf ogt, %65, %66 : vector<8x128xf32>
    %cst_47 = arith.constant 0.00999999977 : f32
    %68 = vector.broadcast %cst_47 : f32 to vector<8x128xf32>
    %69 = arith.mulf %68, %65 : vector<8x128xf32>
    %70 = arith.select %67, %65, %69 : vector<8x128xi1>, vector<8x128xf32>
    %71 = arith.truncf %70 : vector<8x128xf32> to vector<8x128xbf16>
    %c0_48 = arith.constant 0 : index
    %c0_49 = arith.constant 0 : index
    %72 = vector.load %arg15[%c0_48, %c0_49] : memref<128x128xbf16, #tpu.memory_space<vmem>>, vector<128x128xbf16>
    %cst_50 = arith.constant dense<0.000000e+00> : vector<8x128xf32>
    %73 = tpu.matmul %71, %72, %cst_50 {dimension_numbers = #tpu.dot_dimension_numbers<[1], [0], [0], [1], [0, 0, 1, 1], [], []>} : vector<8x128xbf16>, vector<128x128xbf16>, vector<8x128xf32> -> vector<8x128xf32>
    %c0_51 = arith.constant 0 : index
    %c0_52 = arith.constant 0 : index
    %74 = vector.load %arg16[%c0_51, %c0_52] : memref<1x128xf32, #tpu.memory_space<vmem>>, vector<1x128xf32>
    %75 = vector.broadcast %74 : vector<1x128xf32> to vector<8x128xf32>
    %76 = arith.addf %73, %75 : vector<8x128xf32>
    %c0_53 = arith.constant 0 : index
    %c0_54 = arith.constant 0 : index
    %77 = vector.load %arg19[%c0_53, %c0_54] : memref<8x128xf32, #tpu.memory_space<vmem>>, vector<8x128xf32>
    tpu.vector_store %arg19[%c0_53, %c0_54], %76 {strides = array<i32>} : memref<8x128xf32, #tpu.memory_space<vmem>>, vector<8x128xf32>,
    return
  }
  func.func @transform_0(%arg0: i32) -> (i32, i32) {
    %c0_i32 = arith.constant 0 : i32
    %c0_i32_0 = arith.constant 0 : i32
    return %arg0, %c0_i32 : i32, i32
  }
  func.func @transform_1(%arg0: i32) -> (i32, i32) {
    %c0_i32 = arith.constant 0 : i32
    %c0_i32_0 = arith.constant 0 : i32
    return %arg0, %c0_i32 : i32, i32
  }
  func.func @transform_2(%arg0: i32) -> (i32, i32) {
    %c0_i32 = arith.constant 0 : i32
    %c0_i32_0 = arith.constant 0 : i32
    %c0_i32_1 = arith.constant 0 : i32
    return %c0_i32, %c0_i32_0 : i32, i32
  }
  func.func @transform_3(%arg0: i32) -> (i32, i32) {
    %c0_i32 = arith.constant 0 : i32
    %c0_i32_0 = arith.constant 0 : i32
    %c0_i32_1 = arith.constant 0 : i32
    return %c0_i32, %c0_i32_0 : i32, i32
  }
  func.func @transform_4(%arg0: i32) -> (i32, i32) {
    %c0_i32 = arith.constant 0 : i32
    %c0_i32_0 = arith.constant 0 : i32
    %c0_i32_1 = arith.constant 0 : i32
    return %c0_i32, %c0_i32_0 : i32, i32
  }
  func.func @transform_5(%arg0: i32) -> (i32, i32) {
    %c0_i32 = arith.constant 0 : i32
    %c0_i32_0 = arith.constant 0 : i32
    %c0_i32_1 = arith.constant 0 : i32
    return %c0_i32, %c0_i32_0 : i32, i32
  }
  func.func @transform_6(%arg0: i32) -> (i32, i32) {
    %c0_i32 = arith.constant 0 : i32
    %c0_i32_0 = arith.constant 0 : i32
    %c0_i32_1 = arith.constant 0 : i32
    return %c0_i32, %c0_i32_0 : i32, i32
  }
  func.func @transform_7(%arg0: i32) -> (i32, i32) {
    %c0_i32 = arith.constant 0 : i32
    %c0_i32_0 = arith.constant 0 : i32
    %c0_i32_1 = arith.constant 0 : i32
    return %c0_i32, %c0_i32_0 : i32, i32
  }
  func.func @transform_8(%arg0: i32) -> (i32, i32) {
    %c0_i32 = arith.constant 0 : i32
    %c0_i32_0 = arith.constant 0 : i32
    %c0_i32_1 = arith.constant 0 : i32
    return %c0_i32, %c0_i32_0 : i32, i32
  }
  func.func @transform_9(%arg0: i32) -> (i32, i32) {
    %c0_i32 = arith.constant 0 : i32
    %c0_i32_0 = arith.constant 0 : i32
    %c0_i32_1 = arith.constant 0 : i32
    return %c0_i32, %c0_i32_0 : i32, i32
  }
  func.func @transform_10(%arg0: i32) -> (i32, i32) {
    %c0_i32 = arith.constant 0 : i32
    %c0_i32_0 = arith.constant 0 : i32
    %c0_i32_1 = arith.constant 0 : i32
    return %c0_i32, %c0_i32_0 : i32, i32
  }
  func.func @transform_11(%arg0: i32) -> (i32, i32) {
    %c0_i32 = arith.constant 0 : i32
    %c0_i32_0 = arith.constant 0 : i32
    %c0_i32_1 = arith.constant 0 : i32
    return %c0_i32, %c0_i32_0 : i32, i32
  }
  func.func @transform_12(%arg0: i32) -> (i32, i32) {
    %c0_i32 = arith.constant 0 : i32
    %c0_i32_0 = arith.constant 0 : i32
    %c0_i32_1 = arith.constant 0 : i32
    return %c0_i32, %c0_i32_0 : i32, i32
  }
  func.func @transform_13(%arg0: i32) -> (i32, i32) {
    %c0_i32 = arith.constant 0 : i32
    %c0_i32_0 = arith.constant 0 : i32
    %c0_i32_1 = arith.constant 0 : i32
    return %c0_i32, %c0_i32_0 : i32, i32
  }
  func.func @transform_14(%arg0: i32) -> (i32, i32) {
    %c0_i32 = arith.constant 0 : i32
    %c0_i32_0 = arith.constant 0 : i32
    %c0_i32_1 = arith.constant 0 : i32
    return %c0_i32, %c0_i32_0 : i32, i32
  }
  func.func @transform_15(%arg0: i32) -> (i32, i32) {
    %c0_i32 = arith.constant 0 : i32
    %c0_i32_0 = arith.constant 0 : i32
    %c0_i32_1 = arith.constant 0 : i32
    return %c0_i32, %c0_i32_0 : i32, i32
  }
  func.func @transform_16(%arg0: i32) -> (i32, i32) {
    %c0_i32 = arith.constant 0 : i32
    %c0_i32_0 = arith.constant 0 : i32
    return %arg0, %c0_i32 : i32, i32
  }
  func.func @transform_17(%arg0: i32) -> (i32, i32) {
    %c0_i32 = arith.constant 0 : i32
    %c0_i32_0 = arith.constant 0 : i32
    return %arg0, %c0_i32 : i32, i32
  }
  func.func @transform_18(%arg0: i32) -> (i32, i32) {
    %c0_i32 = arith.constant 0 : i32
    %c0_i32_0 = arith.constant 0 : i32
    return %arg0, %c0_i32 : i32, i32
  }
}

</mosaic_0001>

<llo_original>
// kernel: c2ae_forward_train.1
$region0: #{c2ae_forward_train.1}
  #allocation0 [shape = 'u32[]', space=smem, size = 0x4, offset = 0x4, fixed_abs, tag = 'smem constant byte address 0x4 - core index']
  #allocation1 [shape = 'u32[144,128]{1,0:T(1,128)}', space=vmem, size = 0x12000, scoped, tag = 'internal scratch']
  %s0 = inlined_call_operand.hbm [shape: bf16[24,128], index: 0, kind: input, shape index: {}]
  %s1 = inlined_call_operand.hbm [shape: bf16[24,128], index: 1, kind: input, shape index: {}]
  %s2 = inlined_call_operand.hbm [shape: bf16[128,128], index: 2, kind: input, shape index: {}]
  %s3 = inlined_call_operand.vmem [shape: f32[1,128], index: 3, kind: input, shape index: {}]
  %s4 = inlined_call_operand.hbm [shape: bf16[128,128], index: 4, kind: input, shape index: {}]
  %s5 = inlined_call_operand.vmem [shape: f32[1,128], index: 5, kind: input, shape index: {}]
  %s6 = inlined_call_operand.hbm [shape: bf16[128,128], index: 6, kind: input, shape index: {}]
  %s7 = inlined_call_operand.vmem [shape: f32[1,128], index: 7, kind: input, shape index: {}]
  %s8 = inlined_call_operand.hbm [shape: bf16[128,128], index: 8, kind: input, shape index: {}]
  %s9 = inlined_call_operand.vmem [shape: f32[1,128], index: 9, kind: input, shape index: {}]
  %s10 = inlined_call_operand.hbm [shape: bf16[128,128], index: 10, kind: input, shape index: {}]
  %s11 = inlined_call_operand.vmem [shape: f32[1,128], index: 11, kind: input, shape index: {}]
  %s12 = inlined_call_operand.hbm [shape: bf16[128,128], index: 12, kind: input, shape index: {}]
  %s13 = inlined_call_operand.hbm [shape: f32[1,128], index: 13, kind: input, shape index: {}]
  %s14 = inlined_call_operand.hbm [shape: bf16[128,128], index: 14, kind: input, shape index: {}]
  %s15 = inlined_call_operand.hbm [shape: f32[1,128], index: 15, kind: input, shape index: {}]
  %s16 = inlined_call_operand.vmem [shape: f32[24,128], index: 16, kind: output, shape index: {0}]
  %s17 = inlined_call_operand.vmem [shape: f32[24,128], index: 17, kind: output, shape index: {1}]
  %s18 = inlined_call_operand.vmem [shape: f32[24,128], index: 18, kind: output, shape index: {2}]
  %19 = xla_tuple %s16, %s17, %s18
  %s20 = sld [smem:[#allocation0]]
  $region157: #{c2ae_forward_train.1} parent=0
    _
  %s22 = ssub.s32 1, %s20
  %s23 = scalar_select 0, %s22, %s20
  $region1: #{c2ae_forward_train.1} parent=0
    #allocation2 [shape = 'u8[4096]{0}', space=vmem, size = 0x1000, scoped, tag = 'input window, operand 0']
    #allocation3 [shape = 's32[2]{0}', space=sflag, size = 0x8, scoped, tag = 'scoped memory for c2ae_forward_train.1']
    #allocation4 [shape = 'u8[4096]{0}', space=vmem, size = 0x1000, scoped, tag = 'input window, operand 1']
    #allocation5 [shape = 's32[2]{0}', space=sflag, size = 0x8, scoped, tag = 'scoped memory for c2ae_forward_train.1']
    #allocation6 [shape = 'u8[32768]{0}', space=vmem, size = 0x8000, scoped, tag = 'input window, operand 2, single buffered']
    #allocation7 [shape = 'u8[32768]{0}', space=vmem, size = 0x8000, scoped, tag = 'input window, operand 4, single buffered']
    #allocation8 [shape = 's32[1]{0}', space=sflag, size = 0x4, scoped, tag = 'scoped memory for c2ae_forward_train.1']
    #allocation9 [shape = 'u8[32768]{0}', space=vmem, size = 0x8000, scoped, tag = 'input window, operand 6, single buffered']
    #allocation10 [shape = 'u8[32768]{0}', space=vmem, size = 0x8000, scoped, tag = 'input window, operand 8, single buffered']
    #allocation11 [shape = 's32[1]{0}', space=sflag, size = 0x4, scoped, tag = 'scoped memory for c2ae_forward_train.1']
    #allocation12 [shape = 'u8[32768]{0}', space=vmem, size = 0x8000, scoped, tag = 'input window, operand 10, single buffered']
    #allocation13 [shape = 'u8[32768]{0}', space=vmem, size = 0x8000, scoped, tag = 'input window, operand 12, single buffered']
    #allocation14 [shape = 's32[1]{0}', space=sflag, size = 0x4, scoped, tag = 'scoped memory for c2ae_forward_train.1']
    #allocation15 [shape = 'u8[512]{0}', space=vmem, size = 0x400, scoped, tag = 'input window, operand 13, single buffered']
    #allocation16 [shape = 'u8[32768]{0}', space=vmem, size = 0x8000, scoped, tag = 'input window, operand 14, single buffered']
    #allocation17 [shape = 's32[1]{0}', space=sflag, size = 0x4, scoped, tag = 'scoped memory for c2ae_forward_train.1']
    #allocation18 [shape = 'u8[512]{0}', space=vmem, size = 0x400, scoped, tag = 'input window, operand 15, single buffered']
    %24 = vsyncpa [#allocation3], 0
    %s25 = scalar_lea.sflag [#allocation3], 1
    %26 = vsyncpa %s25, 0
    %27 = vsyncpa [#allocation5], 0
    %s28 = scalar_lea.sflag [#allocation5], 1
    %29 = vsyncpa %s28, 0
    %30 = vsyncpa [#allocation8], 0
    %31 = vsyncpa [#allocation11], 0
    %32 = vsyncpa [#allocation14], 0
    %33 = vsyncpa [#allocation17], 0
    loop: start=0, step=1, limit=5
    $region2: #{c2ae_forward_train.1} parent=1 // loop_pre_header
      _
    $region3: #{c2ae_forward_train.1} parent=1 // loop_header
      %s35 = sphi 0, %s39
      %p36 = scmp.ge.s32.totalorder %s35, 5
      %s45 = sphi 0, %s47
      %s48 = sphi 0, %s45
      %s49 = sphi 0, %s48
      %s65 = sphi 0, %s49
      %s71 = sphi 0, %s73
      %s74 = sphi 0, %s71
      %s75 = sphi 0, %s74
      %s91 = sphi 0, %s75
      %s95 = sphi 0, %s95
      %s97 = sphi 0, %s95
      %s98 = sphi 0, %s97
      %s112 = sphi 0, %s98
      %s116 = sphi 0, %s116
      %s118 = sphi 0, %s116
      %s119 = sphi 0, %s118
      %s133 = sphi 0, %s119
      %s137 = sphi 0, %s137
      %s139 = sphi 0, %s137
      %s140 = sphi 0, %s139
      %s154 = sphi 0, %s140
      %s158 = sphi 0, %s158
      %s160 = sphi 0, %s158
      %s161 = sphi 0, %s160
      %s175 = sphi 0, %s161
      %s179 = sphi 0, %s179
      %s181 = sphi 0, %s179
      %s182 = sphi 0, %s181
      %s196 = sphi 0, %s182
      %s200 = sphi 0, %s200
      %s202 = sphi 0, %s200
      %s203 = sphi 0, %s202
      %s217 = sphi 0, %s203
      %s221 = sphi 0, %s221
      %s223 = sphi 0, %s221
      %s224 = sphi 0, %s223
      %s238 = sphi 0, %s224
      %s242 = sphi 0, %s242
      %s244 = sphi 0, %s242
      %s245 = sphi 0, %s244
      %s259 = sphi 0, %s245
      %s263 = sphi 0, %s263
      %s265 = sphi 0, %s263
      %s266 = sphi 0, %s265
      %s280 = sphi 0, %s266
      %s284 = sphi 0, %s284
      %s286 = sphi 0, %s284
      %s287 = sphi 0, %s286
      %s301 = sphi 0, %s287
      %s305 = sphi 0, %s305
      %s307 = sphi 0, %s305
      %s308 = sphi 0, %s307
      %s322 = sphi 0, %s308
      %s326 = sphi 0, %s326
      %s328 = sphi 0, %s326
      %s329 = sphi 0, %s328
      %s343 = sphi 0, %s329
      %s347 = sphi 0, %s347
      %s349 = sphi 0, %s347
      %s350 = sphi 0, %s349
      %s364 = sphi 0, %s350
      %s368 = sphi 0, %s368
      %s370 = sphi 0, %s368
      %s371 = sphi 0, %s370
      %s385 = sphi 0, %s371
      %s391 = sphi 0, %s393
      %s394 = sphi 0, %s391
      %s395 = sphi 0, %s394
      %s411 = sphi 0, %s395
      %s417 = sphi 0, %s419
      %s420 = sphi 0, %s417
      %s421 = sphi 0, %s420
      %s437 = sphi 0, %s421
      %s443 = sphi 0, %s445
      %s446 = sphi 0, %s443
      %s447 = sphi 0, %s446
      %s463 = sphi 0, %s447
    $region4: #{c2ae_forward_train.1} parent=1 // loop_header_branch
      %38 = sbr.rel (%p36) target = $region8
    $region5: #{c2ae_forward_train.1} parent=1 // loop_body
      %s40 = ssub.s32 %s35, 1
      %s41 = ssub.s32 %s35, 2
      %s42 = sadd.s32 %s35, 1
      %s43 = ssub.s32 %s35, %s42
      %p44 = scmp.eq.s32.totalorder %s43, 0
      %s46 = sadd.s32 %s45, 1
      %s47 = scalar_select %p44, %s45, %s46
      %p50 = pneg %p44
      %p51 = scmp.eq.s32.totalorder %s35, 2
      %p52 = por %p50, %p51
      %p53 = scmp.ne.s32.totalorder %s45, %s48
      %p54 = scmp.eq.s32.totalorder %s35, 0
      %p55 = por %p53, %p54
      %p56 = scmp.ne.s32.totalorder %s45, %s48
      %p57 = scmp.eq.s32.totalorder %s40, 2
      %p58 = por %p56, %p57
      %p59 = scmp.ne.s32.totalorder %s48, %s49
      %p60 = scmp.eq.s32.totalorder %s40, 0
      %p61 = por %p59, %p60
      %p62 = scmp.ne.s32.totalorder %s48, %s49
      %p63 = scmp.eq.s32.totalorder %s41, 2
      %p64 = por %p62, %p63
      %p66 = scmp.ne.s32.totalorder %s49, %s65
      %p67 = scmp.eq.s32.totalorder %s41, 0
      %p68 = por %p66, %p67
      %s69 = ssub.s32 %s35, %s42
      %p70 = scmp.eq.s32.totalorder %s69, 0
      %s72 = sadd.s32 %s71, 1
      %s73 = scalar_select %p70, %s71, %s72
      %p76 = pneg %p70
      %p77 = scmp.eq.s32.totalorder %s35, 2
      %p78 = por %p76, %p77
      %p79 = scmp.ne.s32.totalorder %s71, %s74
      %p80 = scmp.eq.s32.totalorder %s35, 0
      %p81 = por %p79, %p80
      %p82 = scmp.ne.s32.totalorder %s71, %s74
      %p83 = scmp.eq.s32.totalorder %s40, 2
      %p84 = por %p82, %p83
      %p85 = scmp.ne.s32.totalorder %s74, %s75
      %p86 = scmp.eq.s32.totalorder %s40, 0
      %p87 = por %p85, %p86
      %p88 = scmp.ne.s32.totalorder %s74, %s75
      %p89 = scmp.eq.s32.totalorder %s41, 2
      %p90 = por %p88, %p89
      %p92 = scmp.ne.s32.totalorder %s75, %s91
      %p93 = scmp.eq.s32.totalorder %s41, 0
      %p94 = por %p92, %p93
      %s96 = sadd.s32 %s95, 1
      %p99 = scmp.eq.s32.totalorder %s35, 2
      %p100 = scmp.ne.s32.totalorder %s95, %s97
      %p101 = scmp.eq.s32.totalorder %s35, 0
      %p102 = por %p100, %p101
      %p103 = scmp.ne.s32.totalorder %s95, %s97
      %p104 = scmp.eq.s32.totalorder %s40, 2
      %p105 = por %p103, %p104
      %p106 = scmp.ne.s32.totalorder %s97, %s98
      %p107 = scmp.eq.s32.totalorder %s40, 0
      %p108 = por %p106, %p107
      %p109 = scmp.ne.s32.totalorder %s97, %s98
      %p110 = scmp.eq.s32.totalorder %s41, 2
      %p111 = por %p109, %p110
      %p113 = scmp.ne.s32.totalorder %s98, %s112
      %p114 = scmp.eq.s32.totalorder %s41, 0
      %p115 = por %p113, %p114
      %s117 = sadd.s32 %s116, 1
      %p120 = scmp.eq.s32.totalorder %s35, 2
      %p121 = scmp.ne.s32.totalorder %s116, %s118
      %p122 = scmp.eq.s32.totalorder %s35, 0
      %p123 = por %p121, %p122
      %p124 = scmp.ne.s32.totalorder %s116, %s118
      %p125 = scmp.eq.s32.totalorder %s40, 2
      %p126 = por %p124, %p125
      %p127 = scmp.ne.s32.totalorder %s118, %s119
      %p128 = scmp.eq.s32.totalorder %s40, 0
      %p129 = por %p127, %p128
      %p130 = scmp.ne.s32.totalorder %s118, %s119
      %p131 = scmp.eq.s32.totalorder %s41, 2
      %p132 = por %p130, %p131
      %p134 = scmp.ne.s32.totalorder %s119, %s133
      %p135 = scmp.eq.s32.totalorder %s41, 0
      %p136 = por %p134, %p135
      %s138 = sadd.s32 %s137, 1
      %p141 = scmp.eq.s32.totalorder %s35, 2
      %p142 = scmp.ne.s32.totalorder %s137, %s139
      %p143 = scmp.eq.s32.totalorder %s35, 0
      %p144 = por %p142, %p143
      %p145 = scmp.ne.s32.totalorder %s137, %s139
      %p146 = scmp.eq.s32.totalorder %s40, 2
      %p147 = por %p145, %p146
      %p148 = scmp.ne.s32.totalorder %s139, %s140
      %p149 = scmp.eq.s32.totalorder %s40, 0
      %p150 = por %p148, %p149
      %p151 = scmp.ne.s32.totalorder %s139, %s140
      %p152 = scmp.eq.s32.totalorder %s41, 2
      %p153 = por %p151, %p152
      %p155 = scmp.ne.s32.totalorder %s140, %s154
      %p156 = scmp.eq.s32.totalorder %s41, 0
      %p157 = por %p155, %p156
      %s159 = sadd.s32 %s158, 1
      %p162 = scmp.eq.s32.totalorder %s35, 2
      %p163 = scmp.ne.s32.totalorder %s158, %s160
      %p164 = scmp.eq.s32.totalorder %s35, 0
      %p165 = por %p163, %p164
      %p166 = scmp.ne.s32.totalorder %s158, %s160
      %p167 = scmp.eq.s32.totalorder %s40, 2
      %p168 = por %p166, %p167
      %p169 = scmp.ne.s32.totalorder %s160, %s161
      %p170 = scmp.eq.s32.totalorder %s40, 0
      %p171 = por %p169, %p170
      %p172 = scmp.ne.s32.totalorder %s160, %s161
      %p173 = scmp.eq.s32.totalorder %s41, 2
      %p174 = por %p172, %p173
      %p176 = scmp.ne.s32.totalorder %s161, %s175
      %p177 = scmp.eq.s32.totalorder %s41, 0
      %p178 = por %p176, %p177
      %s180 = sadd.s32 %s179, 1
      %p183 = scmp.eq.s32.totalorder %s35, 2
      %p184 = scmp.ne.s32.totalorder %s179, %s181
      %p185 = scmp.eq.s32.totalorder %s35, 0
      %p186 = por %p184, %p185
      %p187 = scmp.ne.s32.totalorder %s179, %s181
      %p188 = scmp.eq.s32.totalorder %s40, 2
      %p189 = por %p187, %p188
      %p190 = scmp.ne.s32.totalorder %s181, %s182
      %p191 = scmp.eq.s32.totalorder %s40, 0
      %p192 = por %p190, %p191
      %p193 = scmp.ne.s32.totalorder %s181, %s182
      %p194 = scmp.eq.s32.totalorder %s41, 2
      %p195 = por %p193, %p194
      %p197 = scmp.ne.s32.totalorder %s182, %s196
      %p198 = scmp.eq.s32.totalorder %s41, 0
      %p199 = por %p197, %p198
      %s201 = sadd.s32 %s200, 1
      %p204 = scmp.eq.s32.totalorder %s35, 2
      %p205 = scmp.ne.s32.totalorder %s200, %s202
      %p206 = scmp.eq.s32.totalorder %s35, 0
      %p207 = por %p205, %p206
      %p208 = scmp.ne.s32.totalorder %s200, %s202
      %p209 = scmp.eq.s32.totalorder %s40, 2
      %p210 = por %p208, %p209
      %p211 = scmp.ne.s32.totalorder %s202, %s203
      %p212 = scmp.eq.s32.totalorder %s40, 0
      %p213 = por %p211, %p212
      %p214 = scmp.ne.s32.totalorder %s202, %s203
      %p215 = scmp.eq.s32.totalorder %s41, 2
      %p216 = por %p214, %p215
      %p218 = scmp.ne.s32.totalorder %s203, %s217
      %p219 = scmp.eq.s32.totalorder %s41, 0
      %p220 = por %p218, %p219
      %s222 = sadd.s32 %s221, 1
      %p225 = scmp.eq.s32.totalorder %s35, 2
      %p226 = scmp.ne.s32.totalorder %s221, %s223
      %p227 = scmp.eq.s32.totalorder %s35, 0
      %p228 = por %p226, %p227
      %p229 = scmp.ne.s32.totalorder %s221, %s223
      %p230 = scmp.eq.s32.totalorder %s40, 2
      %p231 = por %p229, %p230
      %p232 = scmp.ne.s32.totalorder %s223, %s224
      %p233 = scmp.eq.s32.totalorder %s40, 0
      %p234 = por %p232, %p233
      %p235 = scmp.ne.s32.totalorder %s223, %s224
      %p236 = scmp.eq.s32.totalorder %s41, 2
      %p237 = por %p235, %p236
      %p239 = scmp.ne.s32.totalorder %s224, %s238
      %p240 = scmp.eq.s32.totalorder %s41, 0
      %p241 = por %p239, %p240
      %s243 = sadd.s32 %s242, 1
      %p246 = scmp.eq.s32.totalorder %s35, 2
      %p247 = scmp.ne.s32.totalorder %s242, %s244
      %p248 = scmp.eq.s32.totalorder %s35, 0
      %p249 = por %p247, %p248
      %p250 = scmp.ne.s32.totalorder %s242, %s244
      %p251 = scmp.eq.s32.totalorder %s40, 2
      %p252 = por %p250, %p251
      %p253 = scmp.ne.s32.totalorder %s244, %s245
      %p254 = scmp.eq.s32.totalorder %s40, 0
      %p255 = por %p253, %p254
      %p256 = scmp.ne.s32.totalorder %s244, %s245
      %p257 = scmp.eq.s32.totalorder %s41, 2
      %p258 = por %p256, %p257
      %p260 = scmp.ne.s32.totalorder %s245, %s259
      %p261 = scmp.eq.s32.totalorder %s41, 0
      %p262 = por %p260, %p261
      %s264 = sadd.s32 %s263, 1
      %p267 = scmp.eq.s32.totalorder %s35, 2
      %p268 = scmp.ne.s32.totalorder %s263, %s265
      %p269 = scmp.eq.s32.totalorder %s35, 0
      %p270 = por %p268, %p269
      %p271 = scmp.ne.s32.totalorder %s263, %s265
      %p272 = scmp.eq.s32.totalorder %s40, 2
      %p273 = por %p271, %p272
      %p274 = scmp.ne.s32.totalorder %s265, %s266
      %p275 = scmp.eq.s32.totalorder %s40, 0
      %p276 = por %p274, %p275
      %p277 = scmp.ne.s32.totalorder %s265, %s266
      %p278 = scmp.eq.s32.totalorder %s41, 2
      %p279 = por %p277, %p278
      %p281 = scmp.ne.s32.totalorder %s266, %s280
      %p282 = scmp.eq.s32.totalorder %s41, 0
      %p283 = por %p281, %p282
      %s285 = sadd.s32 %s284, 1
      %p288 = scmp.eq.s32.totalorder %s35, 2
      %p289 = scmp.ne.s32.totalorder %s284, %s286
      %p290 = scmp.eq.s32.totalorder %s35, 0
      %p291 = por %p289, %p290
      %p292 = scmp.ne.s32.totalorder %s284, %s286
      %p293 = scmp.eq.s32.totalorder %s40, 2
      %p294 = por %p292, %p293
      %p295 = scmp.ne.s32.totalorder %s286, %s287
      %p296 = scmp.eq.s32.totalorder %s40, 0
      %p297 = por %p295, %p296
      %p298 = scmp.ne.s32.totalorder %s286, %s287
      %p299 = scmp.eq.s32.totalorder %s41, 2
      %p300 = por %p298, %p299
      %p302 = scmp.ne.s32.totalorder %s287, %s301
      %p303 = scmp.eq.s32.totalorder %s41, 0
      %p304 = por %p302, %p303
      %s306 = sadd.s32 %s305, 1
      %p309 = scmp.eq.s32.totalorder %s35, 2
      %p310 = scmp.ne.s32.totalorder %s305, %s307
      %p311 = scmp.eq.s32.totalorder %s35, 0
      %p312 = por %p310, %p311
      %p313 = scmp.ne.s32.totalorder %s305, %s307
      %p314 = scmp.eq.s32.totalorder %s40, 2
      %p315 = por %p313, %p314
      %p316 = scmp.ne.s32.totalorder %s307, %s308
      %p317 = scmp.eq.s32.totalorder %s40, 0
      %p318 = por %p316, %p317
      %p319 = scmp.ne.s32.totalorder %s307, %s308
      %p320 = scmp.eq.s32.totalorder %s41, 2
      %p321 = por %p319, %p320
      %p323 = scmp.ne.s32.totalorder %s308, %s322
      %p324 = scmp.eq.s32.totalorder %s41, 0
      %p325 = por %p323, %p324
      %s327 = sadd.s32 %s326, 1
      %p330 = scmp.eq.s32.totalorder %s35, 2
      %p331 = scmp.ne.s32.totalorder %s326, %s328
      %p332 = scmp.eq.s32.totalorder %s35, 0
      %p333 = por %p331, %p332
      %p334 = scmp.ne.s32.totalorder %s326, %s328
      %p335 = scmp.eq.s32.totalorder %s40, 2
      %p336 = por %p334, %p335
      %p337 = scmp.ne.s32.totalorder %s328, %s329
      %p338 = scmp.eq.s32.totalorder %s40, 0
      %p339 = por %p337, %p338
      %p340 = scmp.ne.s32.totalorder %s328, %s329
      %p341 = scmp.eq.s32.totalorder %s41, 2
      %p342 = por %p340, %p341
      %p344 = scmp.ne.s32.totalorder %s329, %s343
      %p345 = scmp.eq.s32.totalorder %s41, 0
      %p346 = por %p344, %p345
      %s348 = sadd.s32 %s347, 1
      %p351 = scmp.eq.s32.totalorder %s35, 2
      %p352 = scmp.ne.s32.totalorder %s347, %s349
      %p353 = scmp.eq.s32.totalorder %s35, 0
      %p354 = por %p352, %p353
      %p355 = scmp.ne.s32.totalorder %s347, %s349
      %p356 = scmp.eq.s32.totalorder %s40, 2
      %p357 = por %p355, %p356
      %p358 = scmp.ne.s32.totalorder %s349, %s350
      %p359 = scmp.eq.s32.totalorder %s40, 0
      %p360 = por %p358, %p359
      %p361 = scmp.ne.s32.totalorder %s349, %s350
      %p362 = scmp.eq.s32.totalorder %s41, 2
      %p363 = por %p361, %p362
      %p365 = scmp.ne.s32.totalorder %s350, %s364
      %p366 = scmp.eq.s32.totalorder %s41, 0
      %p367 = por %p365, %p366
      %s369 = sadd.s32 %s368, 1
      %p372 = scmp.eq.s32.totalorder %s35, 2
      %p373 = scmp.ne.s32.totalorder %s368, %s370
      %p374 = scmp.eq.s32.totalorder %s35, 0
      %p375 = por %p373, %p374
      %p376 = scmp.ne.s32.totalorder %s368, %s370
      %p377 = scmp.eq.s32.totalorder %s40, 2
      %p378 = por %p376, %p377
      %p379 = scmp.ne.s32.totalorder %s370, %s371
      %p380 = scmp.eq.s32.totalorder %s40, 0
      %p381 = por %p379, %p380
      %p382 = scmp.ne.s32.totalorder %s370, %s371
      %p383 = scmp.eq.s32.totalorder %s41, 2
      %p384 = por %p382, %p383
      %p386 = scmp.ne.s32.totalorder %s371, %s385
      %p387 = scmp.eq.s32.totalorder %s41, 0
      %p388 = por %p386, %p387
      %s389 = ssub.s32 %s35, %s42
      %p390 = scmp.eq.s32.totalorder %s389, 0
      %s392 = sadd.s32 %s391, 1
      %s393 = scalar_select %p390, %s391, %s392
      %p396 = pneg %p390
      %p397 = scmp.eq.s32.totalorder %s35, 2
      %p398 = por %p396, %p397
      %p399 = scmp.ne.s32.totalorder %s391, %s394
      %p400 = scmp.eq.s32.totalorder %s35, 0
      %p401 = por %p399, %p400
      %p402 = scmp.ne.s32.totalorder %s391, %s394
      %p403 = scmp.eq.s32.totalorder %s40, 2
      %p404 = por %p402, %p403
      %p405 = scmp.ne.s32.totalorder %s394, %s395
      %p406 = scmp.eq.s32.totalorder %s40, 0
      %p407 = por %p405, %p406
      %p408 = scmp.ne.s32.totalorder %s394, %s395
      %p409 = scmp.eq.s32.totalorder %s41, 2
      %p410 = por %p408, %p409
      %p412 = scmp.ne.s32.totalorder %s395, %s411
      %p413 = scmp.eq.s32.totalorder %s41, 0
      %p414 = por %p412, %p413
      %s415 = ssub.s32 %s35, %s42
      %p416 = scmp.eq.s32.totalorder %s415, 0
      %s418 = sadd.s32 %s417, 1
      %s419 = scalar_select %p416, %s417, %s418
      %p422 = pneg %p416
      %p423 = scmp.eq.s32.totalorder %s35, 2
      %p424 = por %p422, %p423
      %p425 = scmp.ne.s32.totalorder %s417, %s420
      %p426 = scmp.eq.s32.totalorder %s35, 0
      %p427 = por %p425, %p426
      %p428 = scmp.ne.s32.totalorder %s417, %s420
      %p429 = scmp.eq.s32.totalorder %s40, 2
      %p430 = por %p428, %p429
      %p431 = scmp.ne.s32.totalorder %s420, %s421
      %p432 = scmp.eq.s32.totalorder %s40, 0
      %p433 = por %p431, %p432
      %p434 = scmp.ne.s32.totalorder %s420, %s421
      %p435 = scmp.eq.s32.totalorder %s41, 2
      %p436 = por %p434, %p435
      %p438 = scmp.ne.s32.totalorder %s421, %s437
      %p439 = scmp.eq.s32.totalorder %s41, 0
      %p440 = por %p438, %p439
      %s441 = ssub.s32 %s35, %s42
      %p442 = scmp.eq.s32.totalorder %s441, 0
      %s444 = sadd.s32 %s443, 1
      %s445 = scalar_select %p442, %s443, %s444
      %p448 = pneg %p442
      %p449 = scmp.eq.s32.totalorder %s35, 2
      %p450 = por %p448, %p449
      %p451 = scmp.ne.s32.totalorder %s443, %s446
      %p452 = scmp.eq.s32.totalorder %s35, 0
      %p453 = por %p451, %p452
      %p454 = scmp.ne.s32.totalorder %s443, %s446
      %p455 = scmp.eq.s32.totalorder %s40, 2
      %p456 = por %p454, %p455
      %p457 = scmp.ne.s32.totalorder %s446, %s447
      %p458 = scmp.eq.s32.totalorder %s40, 0
      %p459 = por %p457, %p458
      %p460 = scmp.ne.s32.totalorder %s446, %s447
      %p461 = scmp.eq.s32.totalorder %s41, 2
      %p462 = por %p460, %p461
      %p464 = scmp.ne.s32.totalorder %s447, %s463
      %p465 = scmp.eq.s32.totalorder %s41, 0
      %p466 = por %p464, %p465
      %p467 = scmp.le.s32.totalorder 1, %s35
      %p468 = scmp.lt.s32.totalorder %s35, 4
      %p469 = pnand %p467, %p468
      %p470 = pneg %p469
      // Predicated region
      $region9: #{c2ae_forward_train.1} parent=5 // pred_check
        _
      $region10: #{c2ae_forward_train.1} parent=5 // pred_check_branch
        %472 = sbr.rel (%p469) target = $region12
      $region11: #{c2ae_forward_train.1} parent=5 // pred_region
        %s473 = ssub.s32 %s35, 1
        // Predicated region
        $region13: #{c2ae_forward_train.1} parent=11 // pred_check
          %p474 = pneg %p108
        $region14: #{c2ae_forward_train.1} parent=11 // pred_check_branch
          %476 = sbr.rel (%p474) target = $region16
        $region15: #{c2ae_forward_train.1} parent=11 // pred_region
          %s478 = ssub.s32 1024, 1024
          %479 = vsyncadd [#allocation5], %s478
          %s480 = sshll.u32 [#allocation6], 4
          %s481 = int_to_ptr.vmem [resolvable:$true] %s480
          %486 = dma.hbm_to_vmem [thread:$0]  %s2, 1024, %s481, [#allocation5], 64, 64, 4
        $region16: #{c2ae_forward_train.1} parent=11 // pred_fallthru
          _
        // Predicated region
        $region17: #{c2ae_forward_train.1} parent=11 // pred_check
          %p487 = pneg %p129
        $region18: #{c2ae_forward_train.1} parent=11 // pred_check_branch
          %489 = sbr.rel (%p487) target = $region20
        $region19: #{c2ae_forward_train.1} parent=11 // pred_region
          _
        $region20: #{c2ae_forward_train.1} parent=11 // pred_fallthru
          _
        // Predicated region
        $region21: #{c2ae_forward_train.1} parent=11 // pred_check
          %p490 = pneg %p150
        $region22: #{c2ae_forward_train.1} parent=11 // pred_check_branch
          %492 = sbr.rel (%p490) target = $region24
        $region23: #{c2ae_forward_train.1} parent=11 // pred_region
          %s494 = ssub.s32 1024, 1024
          %495 = vsyncadd [#allocation8], %s494
          %s496 = sshll.u32 [#allocation7], 4
          %s497 = int_to_ptr.vmem [resolvable:$true] %s496
          %502 = dma.hbm_to_vmem [thread:$0]  %s4, 1024, %s497, [#allocation8], 64, 64, 4
        $region24: #{c2ae_forward_train.1} parent=11 // pred_fallthru
          _
        // Predicated region
        $region25: #{c2ae_forward_train.1} parent=11 // pred_check
          %p503 = pneg %p171
        $region26: #{c2ae_forward_train.1} parent=11 // pred_check_branch
          %505 = sbr.rel (%p503) target = $region28
        $region27: #{c2ae_forward_train.1} parent=11 // pred_region
          _
        $region28: #{c2ae_forward_train.1} parent=11 // pred_fallthru
          _
        // Predicated region
        $region29: #{c2ae_forward_train.1} parent=11 // pred_check
          %p506 = pneg %p192
        $region30: #{c2ae_forward_train.1} parent=11 // pred_check_branch
          %508 = sbr.rel (%p506) target = $region32
        $region31: #{c2ae_forward_train.1} parent=11 // pred_region
          %s510 = ssub.s32 1024, 1024
          %511 = vsyncadd [#allocation8], %s510
          %s512 = sshll.u32 [#allocation9], 4
          %s513 = int_to_ptr.vmem [resolvable:$true] %s512
          %518 = dma.hbm_to_vmem [thread:$0]  %s6, 1024, %s513, [#allocation8], 64, 64, 4
        $region32: #{c2ae_forward_train.1} parent=11 // pred_fallthru
          _
        // Predicated region
        $region33: #{c2ae_forward_train.1} parent=11 // pred_check
          %p519 = pneg %p213
        $region34: #{c2ae_forward_train.1} parent=11 // pred_check_branch
          %521 = sbr.rel (%p519) target = $region36
        $region35: #{c2ae_forward_train.1} parent=11 // pred_region
          _
        $region36: #{c2ae_forward_train.1} parent=11 // pred_fallthru
          _
        // Predicated region
        $region37: #{c2ae_forward_train.1} parent=11 // pred_check
          %p522 = pneg %p234
        $region38: #{c2ae_forward_train.1} parent=11 // pred_check_branch
          %524 = sbr.rel (%p522) target = $region40
        $region39: #{c2ae_forward_train.1} parent=11 // pred_region
          %s526 = ssub.s32 1024, 1024
          %527 = vsyncadd [#allocation11], %s526
          %s528 = sshll.u32 [#allocation10], 4
          %s529 = int_to_ptr.vmem [resolvable:$true] %s528
          %534 = dma.hbm_to_vmem [thread:$0]  %s8, 1024, %s529, [#allocation11], 64, 64, 4
        $region40: #{c2ae_forward_train.1} parent=11 // pred_fallthru
          _
        // Predicated region
        $region41: #{c2ae_forward_train.1} parent=11 // pred_check
          %p535 = pneg %p255
        $region42: #{c2ae_forward_train.1} parent=11 // pred_check_branch
          %537 = sbr.rel (%p535) target = $region44
        $region43: #{c2ae_forward_train.1} parent=11 // pred_region
          _
        $region44: #{c2ae_forward_train.1} parent=11 // pred_fallthru
          _
        // Predicated region
        $region45: #{c2ae_forward_train.1} parent=11 // pred_check
          %p538 = pneg %p276
        $region46: #{c2ae_forward_train.1} parent=11 // pred_check_branch
          %540 = sbr.rel (%p538) target = $region48
        $region47: #{c2ae_forward_train.1} parent=11 // pred_region
          %s542 = ssub.s32 1024, 1024
          %543 = vsyncadd [#allocation11], %s542
          %s544 = sshll.u32 [#allocation12], 4
          %s545 = int_to_ptr.vmem [resolvable:$true] %s544
          %550 = dma.hbm_to_vmem [thread:$0]  %s10, 1024, %s545, [#allocation11], 64, 64, 4
        $region48: #{c2ae_forward_train.1} parent=11 // pred_fallthru
          _
        // Predicated region
        $region49: #{c2ae_forward_train.1} parent=11 // pred_check
          %p551 = pneg %p297
        $region50: #{c2ae_forward_train.1} parent=11 // pred_check_branch
          %553 = sbr.rel (%p551) target = $region52
        $region51: #{c2ae_forward_train.1} parent=11 // pred_region
          _
        $region52: #{c2ae_forward_train.1} parent=11 // pred_fallthru
          _
        // Predicated region
        $region53: #{c2ae_forward_train.1} parent=11 // pred_check
          %p554 = pneg %p318
        $region54: #{c2ae_forward_train.1} parent=11 // pred_check_branch
          %556 = sbr.rel (%p554) target = $region56
        $region55: #{c2ae_forward_train.1} parent=11 // pred_region
          %s558 = ssub.s32 1024, 1024
          %559 = vsyncadd [#allocation14], %s558
          %s560 = sshll.u32 [#allocation13], 4
          %s561 = int_to_ptr.vmem [resolvable:$true] %s560
          %566 = dma.hbm_to_vmem [thread:$0]  %s12, 1024, %s561, [#allocation14], 64, 64, 4
        $region56: #{c2ae_forward_train.1} parent=11 // pred_fallthru
          _
        // Predicated region
        $region57: #{c2ae_forward_train.1} parent=11 // pred_check
          %p567 = pneg %p339
        $region58: #{c2ae_forward_train.1} parent=11 // pred_check_branch
          %569 = sbr.rel (%p567) target = $region60
        $region59: #{c2ae_forward_train.1} parent=11 // pred_region
          %s571 = ssub.s32 16, 16
          %572 = vsyncadd [#allocation14], %s571
          %s574 = sshll.u32 [#allocation15], 4
          %s575 = int_to_ptr.vmem [resolvable:$true] %s574
          %577 = dma.hbm_to_vmem [thread:$0]  %s13, 16, %s575, [#allocation14]
        $region60: #{c2ae_forward_train.1} parent=11 // pred_fallthru
          _
        // Predicated region
        $region61: #{c2ae_forward_train.1} parent=11 // pred_check
          %p578 = pneg %p360
        $region62: #{c2ae_forward_train.1} parent=11 // pred_check_branch
          %580 = sbr.rel (%p578) target = $region64
        $region63: #{c2ae_forward_train.1} parent=11 // pred_region
          %s582 = ssub.s32 1024, 1024
          %583 = vsyncadd [#allocation17], %s582
          %s584 = sshll.u32 [#allocation16], 4
          %s585 = int_to_ptr.vmem [resolvable:$true] %s584
          %590 = dma.hbm_to_vmem [thread:$0]  %s14, 1024, %s585, [#allocation17], 64, 64, 4
        $region64: #{c2ae_forward_train.1} parent=11 // pred_fallthru
          _
        // Predicated region
        $region65: #{c2ae_forward_train.1} parent=11 // pred_check
          %p591 = pneg %p381
        $region66: #{c2ae_forward_train.1} parent=11 // pred_check_branch
          %593 = sbr.rel (%p591) target = $region68
        $region67: #{c2ae_forward_train.1} parent=11 // pred_region
          %s595 = ssub.s32 16, 16
          %596 = vsyncadd [#allocation17], %s595
          %s598 = sshll.u32 [#allocation18], 4
          %s599 = int_to_ptr.vmem [resolvable:$true] %s598
          %601 = dma.hbm_to_vmem [thread:$0]  %s15, 16, %s599, [#allocation17]
        $region68: #{c2ae_forward_train.1} parent=11 // pred_fallthru
          _
      $region12: #{c2ae_forward_train.1} parent=5 // pred_fallthru
        _
      %p602 = scmp.lt.s32.totalorder %s35, 3
      // Predicated region
      $region69: #{c2ae_forward_train.1} parent=5 // pred_check
        %p603 = pneg %p602
      $region70: #{c2ae_forward_train.1} parent=5 // pred_check_branch
        %605 = sbr.rel (%p603) target = $region72
      $region71: #{c2ae_forward_train.1} parent=5 // pred_region
        // Predicated region
        $region73: #{c2ae_forward_train.1} parent=71 // pred_check
          %p606 = pneg %p55
        $region74: #{c2ae_forward_train.1} parent=71 // pred_check_branch
          %608 = sbr.rel (%p606) target = $region76
        $region75: #{c2ae_forward_train.1} parent=71 // pred_region
          %s609 = sand.u32 %s45, 1
          %s610 = scalar_lea.sflag [#allocation3], %s609
          %s611 = sand.u32 %s45, 1
          %s612 = smul.addr %s611, 4
          %s613 = scalar_lea.vmem [#allocation2], %s612
          %s615 = ssub.s32 64, 64
          %616 = vsyncadd %s610, %s615
          %s617 = smul.addr %s35, 64
          %s618 = scalar_lea.hbm %s0, %s617
          %s620 = sshll.u32 %s613, 4
          %s621 = int_to_ptr.vmem [resolvable:$true] %s620
          %623 = dma.hbm_to_vmem [thread:$0]  %s618, 64, %s621, %s610
        $region76: #{c2ae_forward_train.1} parent=71 // pred_fallthru
          _
        // Predicated region
        $region77: #{c2ae_forward_train.1} parent=71 // pred_check
          %p624 = pneg %p81
        $region78: #{c2ae_forward_train.1} parent=71 // pred_check_branch
          %626 = sbr.rel (%p624) target = $region80
        $region79: #{c2ae_forward_train.1} parent=71 // pred_region
          %s627 = sand.u32 %s35, 1
          %s628 = scalar_lea.sflag [#allocation5], %s627
          %s629 = sand.u32 %s71, 1
          %s630 = smul.addr %s629, 4
          %s631 = scalar_lea.vmem [#allocation4], %s630
          %s633 = ssub.s32 64, 64
          %634 = vsyncadd %s628, %s633
          %s635 = smul.addr %s35, 64
          %s636 = scalar_lea.hbm %s1, %s635
          %s638 = sshll.u32 %s631, 4
          %s639 = int_to_ptr.vmem [resolvable:$true] %s638
          %641 = dma.hbm_to_vmem [thread:$0]  %s636, 64, %s639, %s628
        $region80: #{c2ae_forward_train.1} parent=71 // pred_fallthru
          _
      $region72: #{c2ae_forward_train.1} parent=5 // pred_fallthru
        _
      %p642 = scmp.le.s32.totalorder 1, %s35
      %p643 = scmp.lt.s32.totalorder %s35, 4
      %p644 = pnand %p642, %p643
      %p645 = pneg %p644
      // Predicated region
      $region81: #{c2ae_forward_train.1} parent=5 // pred_check
        _
      $region82: #{c2ae_forward_train.1} parent=5 // pred_check_branch
        %647 = sbr.rel (%p644) target = $region84
      $region83: #{c2ae_forward_train.1} parent=5 // pred_region
        %s648 = ssub.s32 %s35, 1
        %s649 = sand.u32 %s48, 1
        %s650 = scalar_lea.sflag [#allocation3], %s649
        %s651 = sand.u32 %s48, 1
        %s652 = smul.addr %s651, 4
        %s653 = scalar_lea.vmem [#allocation2], %s652
        // Predicated region
        $region85: #{c2ae_forward_train.1} parent=83 // pred_check
          %p654 = pneg %p61
        $region86: #{c2ae_forward_train.1} parent=83 // pred_check_branch
          %656 = sbr.rel (%p654) target = $region88
        $region87: #{c2ae_forward_train.1} parent=83 // pred_region
          %657 = dma.done %s650, 64
        $region88: #{c2ae_forward_train.1} parent=83 // pred_fallthru
          _
        %s658 = sand.u32 %s40, 1
        %s659 = scalar_lea.sflag [#allocation5], %s658
        %s660 = sand.u32 %s74, 1
        %s661 = smul.addr %s660, 4
        %s662 = scalar_lea.vmem [#allocation4], %s661
        // Predicated region
        $region89: #{c2ae_forward_train.1} parent=83 // pred_check
          %p663 = pneg %p87
        $region90: #{c2ae_forward_train.1} parent=83 // pred_check_branch
          %665 = sbr.rel (%p663) target = $region92
        $region91: #{c2ae_forward_train.1} parent=83 // pred_region
          %666 = dma.done %s659, 64
        $region92: #{c2ae_forward_train.1} parent=83 // pred_fallthru
          _
        // Predicated region
        $region93: #{c2ae_forward_train.1} parent=83 // pred_check
          %p667 = pneg %p108
        $region94: #{c2ae_forward_train.1} parent=83 // pred_check_branch
          %669 = sbr.rel (%p667) target = $region96
        $region95: #{c2ae_forward_train.1} parent=83 // pred_region
          %670 = dma.done [#allocation5], 1024
        $region96: #{c2ae_forward_train.1} parent=83 // pred_fallthru
          _
        // Predicated region
        $region97: #{c2ae_forward_train.1} parent=83 // pred_check
          %p671 = pneg %p150
        $region98: #{c2ae_forward_train.1} parent=83 // pred_check_branch
          %673 = sbr.rel (%p671) target = $region100
        $region99: #{c2ae_forward_train.1} parent=83 // pred_region
          %674 = dma.done [#allocation8], 1024
        $region100: #{c2ae_forward_train.1} parent=83 // pred_fallthru
          _
        // Predicated region
        $region101: #{c2ae_forward_train.1} parent=83 // pred_check
          %p675 = pneg %p192
        $region102: #{c2ae_forward_train.1} parent=83 // pred_check_branch
          %677 = sbr.rel (%p675) target = $region104
        $region103: #{c2ae_forward_train.1} parent=83 // pred_region
          %678 = dma.done [#allocation8], 1024
        $region104: #{c2ae_forward_train.1} parent=83 // pred_fallthru
          _
        // Predicated region
        $region105: #{c2ae_forward_train.1} parent=83 // pred_check
          %p679 = pneg %p234
        $region106: #{c2ae_forward_train.1} parent=83 // pred_check_branch
          %681 = sbr.rel (%p679) target = $region108
        $region107: #{c2ae_forward_train.1} parent=83 // pred_region
          %682 = dma.done [#allocation11], 1024
        $region108: #{c2ae_forward_train.1} parent=83 // pred_fallthru
          _
        // Predicated region
        $region109: #{c2ae_forward_train.1} parent=83 // pred_check
          %p683 = pneg %p276
        $region110: #{c2ae_forward_train.1} parent=83 // pred_check_branch
          %685 = sbr.rel (%p683) target = $region112
        $region111: #{c2ae_forward_train.1} parent=83 // pred_region
          %686 = dma.done [#allocation11], 1024
        $region112: #{c2ae_forward_train.1} parent=83 // pred_fallthru
          _
        // Predicated region
        $region113: #{c2ae_forward_train.1} parent=83 // pred_check
          %p687 = pneg %p318
        $region114: #{c2ae_forward_train.1} parent=83 // pred_check_branch
          %689 = sbr.rel (%p687) target = $region116
        $region115: #{c2ae_forward_train.1} parent=83 // pred_region
          %690 = dma.done [#allocation14], 1024
        $region116: #{c2ae_forward_train.1} parent=83 // pred_fallthru
          _
        // Predicated region
        $region117: #{c2ae_forward_train.1} parent=83 // pred_check
          %p691 = pneg %p339
        $region118: #{c2ae_forward_train.1} parent=83 // pred_check_branch
          %693 = sbr.rel (%p691) target = $region120
        $region119: #{c2ae_forward_train.1} parent=83 // pred_region
          %694 = dma.done [#allocation14], 16
        $region120: #{c2ae_forward_train.1} parent=83 // pred_fallthru
          _
        // Predicated region
        $region121: #{c2ae_forward_train.1} parent=83 // pred_check
          %p695 = pneg %p360
        $region122: #{c2ae_forward_train.1} parent=83 // pred_check_branch
          %697 = sbr.rel (%p695) target = $region124
        $region123: #{c2ae_forward_train.1} parent=83 // pred_region
          %698 = dma.done [#allocation17], 1024
        $region124: #{c2ae_forward_train.1} parent=83 // pred_fallthru
          _
        // Predicated region
        $region125: #{c2ae_forward_train.1} parent=83 // pred_check
          %p699 = pneg %p381
        $region126: #{c2ae_forward_train.1} parent=83 // pred_check_branch
          %701 = sbr.rel (%p699) target = $region128
        $region127: #{c2ae_forward_train.1} parent=83 // pred_region
          %702 = dma.done [#allocation17], 16
        $region128: #{c2ae_forward_train.1} parent=83 // pred_fallthru
          _
        %s703 = sand.u32 %s48, 1
        %s704 = scalar_lea.sflag [#allocation3], %s703
        %s705 = sand.u32 %s48, 1
        %s706 = smul.addr %s705, 4
        %s707 = scalar_lea.vmem [#allocation2], %s706
        %p708 = pneg %p61
        %p709 = pneg %p58
        %s710 = sand.u32 %s40, 1
        %s711 = scalar_lea.sflag [#allocation5], %s710
        %s712 = sand.u32 %s74, 1
        %s713 = smul.addr %s712, 4
        %s714 = scalar_lea.vmem [#allocation4], %s713
        %p715 = pneg %p87
        %p716 = pneg %p84
        %p717 = pneg %p108
        %p718 = pneg %p105
        %p719 = pneg %p129
        %p720 = pneg %p126
        %p721 = pneg %p150
        %p722 = pneg %p147
        %p723 = pneg %p171
        %p724 = pneg %p168
        %p725 = pneg %p192
        %p726 = pneg %p189
        %p727 = pneg %p213
        %p728 = pneg %p210
        %p729 = pneg %p234
        %p730 = pneg %p231
        %p731 = pneg %p255
        %p732 = pneg %p252
        %p733 = pneg %p276
        %p734 = pneg %p273
        %p735 = pneg %p297
        %p736 = pneg %p294
        %p737 = pneg %p318
        %p738 = pneg %p315
        %p739 = pneg %p339
        %p740 = pneg %p336
        %p741 = pneg %p360
        %p742 = pneg %p357
        %p743 = pneg %p381
        %p744 = pneg %p378
        %p745 = pneg %p407
        %p746 = pneg %p404
        %p747 = scmp.lt.s32.totalorder %s40, 2
        %s748 = scalar_select %p747, %s40, 2
        %s749 = smul.addr %s748, 8
        %s750 = scalar_lea.vmem %s16, %s749
        %p751 = pneg %p433
        %p752 = pneg %p430
        %p753 = scmp.lt.s32.totalorder %s40, 2
        %s754 = scalar_select %p753, %s40, 2
        %s755 = smul.addr %s754, 8
        %s756 = scalar_lea.vmem %s17, %s755
        %p757 = pneg %p459
        %p758 = pneg %p456
        %p759 = scmp.lt.s32.totalorder %s40, 2
        %s760 = scalar_select %p759, %s40, 2
        %s761 = smul.addr %s760, 8
        %s762 = scalar_lea.vmem %s18, %s761
        %p763 = scmp.lt.s32.totalorder %s40, 2
        %s764 = scalar_select %p763, %s40, 2
        %s765 = smul.addr %s764, 8
        %s766 = scalar_lea.vmem %s16, %s765
        %p767 = scmp.lt.s32.totalorder %s40, 2
        %s768 = scalar_select %p767, %s40, 2
        %s769 = smul.addr %s768, 8
        %s770 = scalar_lea.vmem %s17, %s769
        %p771 = scmp.lt.s32.totalorder %s40, 2
        %s772 = scalar_select %p771, %s40, 2
        %s773 = smul.addr %s772, 8
        %s774 = scalar_lea.vmem %s18, %s773
        %v776 = vld [vmem:[%s653] sm:$0xf]
        %v777 = vld [vmem:[#allocation6] sm:$0xf]
        %v778 = vld [vmem:[#allocation6 + $0x4] sm:$0xf]
        %v779 = vld [vmem:[#allocation6 + $0x8] sm:$0xf]
        %v780 = vld [vmem:[#allocation6 + $0xc] sm:$0xf]
        %v781 = vld [vmem:[#allocation6 + $0x10] sm:$0xf]
        %v782 = vld [vmem:[#allocation6 + $0x14] sm:$0xf]
        %v783 = vld [vmem:[#allocation6 + $0x18] sm:$0xf]
        %v784 = vld [vmem:[#allocation6 + $0x1c] sm:$0xf]
        %v785 = vld [vmem:[#allocation6 + $0x20] sm:$0xf]
        %v786 = vld [vmem:[#allocation6 + $0x24] sm:$0xf]
        %v787 = vld [vmem:[#allocation6 + $0x28] sm:$0xf]
        %v788 = vld [vmem:[#allocation6 + $0x2c] sm:$0xf]
        %v789 = vld [vmem:[#allocation6 + $0x30] sm:$0xf]
        %v790 = vld [vmem:[#allocation6 + $0x34] sm:$0xf]
        %v791 = vld [vmem:[#allocation6 + $0x38] sm:$0xf]
        %v792 = vld [vmem:[#allocation6 + $0x3c] sm:$0xf]
        %v793 = vld [vmem:[%s3] sm:$0x1]
        %v795 = vlaneseq
        %v796 = vshrl.u32 %v795, 7
        %v797 = vsub.s32 0, %v796
        %v798 = vrot.slane %v793, %v797
        %v816 = vunpack.c.l.b16 %v777
        %v817 = vunpack.c.l.b16 %v778
        %v818 = vunpack.c.l.b16 %v779
        %v819 = vunpack.c.l.b16 %v780
        %v820 = vunpack.c.l.b16 %v781
        %v821 = vunpack.c.l.b16 %v782
        %v822 = vunpack.c.l.b16 %v783
        %v823 = vunpack.c.l.b16 %v784
        %v824 = vunpack.c.l.b16 %v785
        %v825 = vunpack.c.l.b16 %v786
        %v826 = vunpack.c.l.b16 %v787
        %v827 = vunpack.c.l.b16 %v788
        %v828 = vunpack.c.l.b16 %v789
        %v829 = vunpack.c.l.b16 %v790
        %v830 = vunpack.c.l.b16 %v791
        %v831 = vunpack.c.l.b16 %v792
        %v832 = vpack.c.b16 %v817, %v816
        %v833 = vpack.c.b16 %v819, %v818
        %v834 = vpack.c.b16 %v821, %v820
        %v835 = vpack.c.b16 %v823, %v822
        %v836 = vpack.c.b16 %v825, %v824
        %v837 = vpack.c.b16 %v827, %v826
        %v838 = vpack.c.b16 %v829, %v828
        %v839 = vpack.c.b16 %v831, %v830
        %848 = vmatprep.subr.bf16.mxu0 0
        %849 = vmatpush1.bf16.msra.mxu0 %v839
        %850 = vmatprep.subr.bf16.mxu0 0
        %851 = vmatpush1.bf16.msra.mxu0 %v838
        %852 = vmatprep.subr.bf16.mxu0 0
        %853 = vmatpush1.bf16.msra.mxu0 %v837
        %854 = vmatprep.subr.bf16.mxu0 0
        %855 = vmatpush1.bf16.msra.mxu0 %v836
        %856 = vmatprep.subr.bf16.mxu0 0
        %857 = vmatpush1.bf16.msra.mxu0 %v835
        %858 = vmatprep.subr.bf16.mxu0 0
        %859 = vmatpush1.bf16.msra.mxu0 %v834
        %860 = vmatprep.subr.bf16.mxu0 0
        %861 = vmatpush1.bf16.msra.mxu0 %v833
        %862 = vmatprep.subr.bf16.mxu0 0
        %863 = vmatpush1.bf16.msra.mxu0 %v832
        %864 = vmatprep.subr.bf16.mxu0 0
        %865 = vmatpush2.bf16.msra.mxu0 0
        %866 = vmatprep.subr.bf16.mxu0 0
        %867 = vmatpush2.bf16.msra.mxu0 0
        %868 = vmatprep.subr.bf16.mxu0 0
        %869 = vmatpush2.bf16.msra.mxu0 0
        %870 = vmatprep.subr.bf16.mxu0 0
        %871 = vmatpush2.bf16.msra.mxu0 0
        %872 = vmatprep.subr.bf16.mxu0 0
        %873 = vmatpush2.bf16.msra.mxu0 0
        %874 = vmatprep.subr.bf16.mxu0 0
        %875 = vmatpush2.bf16.msra.mxu0 0
        %876 = vmatprep.subr.bf16.mxu0 0
        %877 = vmatpush2.bf16.msra.mxu0 0
        %878 = vmatprep.subr.bf16.mxu0 0
        %879 = vmatpush2.bf16.msra.mxu0 0
        %880 = vmatprep.mubr.bf16.mxu0 0
        %881 = vmatmul.mubr.bf16.gmra.mxu0 %v776
        %v882 = vpop.f32.mrf.mxu0
        %v883 = vadd.f32 %v798, %v882
        %v884 = vpop.f32.mrf.mxu0
        %v885 = vpop.f32.mrf.mxu0
        %v886 = vpop.f32.mrf.mxu0
        %887 = vdwg.mxu0
        %vm888 = vcmp.gt.f32.partialorder %v883, 0.0
        %v889 = vmul.f32 %v883, 0.01
        %v890 = vsel %vm888, %v883, %v889
        %v891 = vpack.c.bf16 %v890, %v890
        %v892 = vld [vmem:[#allocation7] sm:$0xf]
        %v893 = vld [vmem:[#allocation7 + $0x4] sm:$0xf]
        %v894 = vld [vmem:[#allocation7 + $0x8] sm:$0xf]
        %v895 = vld [vmem:[#allocation7 + $0xc] sm:$0xf]
        %v896 = vld [vmem:[#allocation7 + $0x10] sm:$0xf]
        %v897 = vld [vmem:[#allocation7 + $0x14] sm:$0xf]
        %v898 = vld [vmem:[#allocation7 + $0x18] sm:$0xf]
        %v899 = vld [vmem:[#allocation7 + $0x1c] sm:$0xf]
        %v900 = vld [vmem:[#allocation7 + $0x20] sm:$0xf]
        %v901 = vld [vmem:[#allocation7 + $0x24] sm:$0xf]
        %v902 = vld [vmem:[#allocation7 + $0x28] sm:$0xf]
        %v903 = vld [vmem:[#allocation7 + $0x2c] sm:$0xf]
        %v904 = vld [vmem:[#allocation7 + $0x30] sm:$0xf]
        %v905 = vld [vmem:[#allocation7 + $0x34] sm:$0xf]
        %v906 = vld [vmem:[#allocation7 + $0x38] sm:$0xf]
        %v907 = vld [vmem:[#allocation7 + $0x3c] sm:$0xf]
        %v908 = vld [vmem:[%s5] sm:$0x1]
        %v910 = vlaneseq
        %v911 = vshrl.u32 %v910, 7
        %v912 = vsub.s32 0, %v911
        %v913 = vrot.slane %v908, %v912
        %v931 = vunpack.c.l.b16 %v892
        %v932 = vunpack.c.l.b16 %v893
        %v933 = vunpack.c.l.b16 %v894
        %v934 = vunpack.c.l.b16 %v895
        %v935 = vunpack.c.l.b16 %v896
        %v936 = vunpack.c.l.b16 %v897
        %v937 = vunpack.c.l.b16 %v898
        %v938 = vunpack.c.l.b16 %v899
        %v939 = vunpack.c.l.b16 %v900
        %v940 = vunpack.c.l.b16 %v901
        %v941 = vunpack.c.l.b16 %v902
        %v942 = vunpack.c.l.b16 %v903
        %v943 = vunpack.c.l.b16 %v904
        %v944 = vunpack.c.l.b16 %v905
        %v945 = vunpack.c.l.b16 %v906
        %v946 = vunpack.c.l.b16 %v907
        %v947 = vpack.c.b16 %v932, %v931
        %v948 = vpack.c.b16 %v934, %v933
        %v949 = vpack.c.b16 %v936, %v935
        %v950 = vpack.c.b16 %v938, %v937
        %v951 = vpack.c.b16 %v940, %v939
        %v952 = vpack.c.b16 %v942, %v941
        %v953 = vpack.c.b16 %v944, %v943
        %v954 = vpack.c.b16 %v946, %v945
        %963 = vmatprep.subr.bf16.mxu0 0
        %964 = vmatpush1.bf16.msra.mxu0 %v954
        %965 = vmatprep.subr.bf16.mxu0 0
        %966 = vmatpush1.bf16.msra.mxu0 %v953
        %967 = vmatprep.subr.bf16.mxu0 0
        %968 = vmatpush1.bf16.msra.mxu0 %v952
        %969 = vmatprep.subr.bf16.mxu0 0
        %970 = vmatpush1.bf16.msra.mxu0 %v951
        %971 = vmatprep.subr.bf16.mxu0 0
        %972 = vmatpush1.bf16.msra.mxu0 %v950
        %973 = vmatprep.subr.bf16.mxu0 0
        %974 = vmatpush1.bf16.msra.mxu0 %v949
        %975 = vmatprep.subr.bf16.mxu0 0
        %976 = vmatpush1.bf16.msra.mxu0 %v948
        %977 = vmatprep.subr.bf16.mxu0 0
        %978 = vmatpush1.bf16.msra.mxu0 %v947
        %979 = vmatprep.subr.bf16.mxu0 0
        %980 = vmatpush2.bf16.msra.mxu0 0
        %981 = vmatprep.subr.bf16.mxu0 0
        %982 = vmatpush2.bf16.msra.mxu0 0
        %983 = vmatprep.subr.bf16.mxu0 0
        %984 = vmatpush2.bf16.msra.mxu0 0
        %985 = vmatprep.subr.bf16.mxu0 0
        %986 = vmatpush2.bf16.msra.mxu0 0
        %987 = vmatprep.subr.bf16.mxu0 0
        %988 = vmatpush2.bf16.msra.mxu0 0
        %989 = vmatprep.subr.bf16.mxu0 0
        %990 = vmatpush2.bf16.msra.mxu0 0
        %991 = vmatprep.subr.bf16.mxu0 0
        %992 = vmatpush2.bf16.msra.mxu0 0
        %993 = vmatprep.subr.bf16.mxu0 0
        %994 = vmatpush2.bf16.msra.mxu0 0
        %995 = vmatprep.mubr.bf16.mxu0 0
        %996 = vmatmul.mubr.bf16.gmra.mxu0 %v891
        %v997 = vpop.f32.mrf.mxu0
        %v998 = vadd.f32 %v913, %v997
        %v999 = vpop.f32.mrf.mxu0
        %v1000 = vpop.f32.mrf.mxu0
        %v1001 = vpop.f32.mrf.mxu0
        %1002 = vdwg.mxu0
        %vm1003 = vcmp.gt.f32.partialorder %v998, 0.0
        %v1004 = vmul.f32 %v998, 0.01
        %v1005 = vsel %vm1003, %v998, %v1004
        %v1006 = vpack.c.bf16 %v1005, %v1005
        %v1007 = vld [vmem:[#allocation9] sm:$0xf]
        %v1008 = vld [vmem:[#allocation9 + $0x4] sm:$0xf]
        %v1009 = vld [vmem:[#allocation9 + $0x8] sm:$0xf]
        %v1010 = vld [vmem:[#allocation9 + $0xc] sm:$0xf]
        %v1011 = vld [vmem:[#allocation9 + $0x10] sm:$0xf]
        %v1012 = vld [vmem:[#allocation9 + $0x14] sm:$0xf]
        %v1013 = vld [vmem:[#allocation9 + $0x18] sm:$0xf]
        %v1014 = vld [vmem:[#allocation9 + $0x1c] sm:$0xf]
        %v1015 = vld [vmem:[#allocation9 + $0x20] sm:$0xf]
        %v1016 = vld [vmem:[#allocation9 + $0x24] sm:$0xf]
        %v1017 = vld [vmem:[#allocation9 + $0x28] sm:$0xf]
        %v1018 = vld [vmem:[#allocation9 + $0x2c] sm:$0xf]
        %v1019 = vld [vmem:[#allocation9 + $0x30] sm:$0xf]
        %v1020 = vld [vmem:[#allocation9 + $0x34] sm:$0xf]
        %v1021 = vld [vmem:[#allocation9 + $0x38] sm:$0xf]
        %v1022 = vld [vmem:[#allocation9 + $0x3c] sm:$0xf]
        %v1023 = vld [vmem:[%s7] sm:$0x1]
        %v1025 = vlaneseq
        %v1026 = vshrl.u32 %v1025, 7
        %v1027 = vsub.s32 0, %v1026
        %v1028 = vrot.slane %v1023, %v1027
        %v1046 = vunpack.c.l.b16 %v1007
        %v1047 = vunpack.c.l.b16 %v1008
        %v1048 = vunpack.c.l.b16 %v1009
        %v1049 = vunpack.c.l.b16 %v1010
        %v1050 = vunpack.c.l.b16 %v1011
        %v1051 = vunpack.c.l.b16 %v1012
        %v1052 = vunpack.c.l.b16 %v1013
        %v1053 = vunpack.c.l.b16 %v1014
        %v1054 = vunpack.c.l.b16 %v1015
        %v1055 = vunpack.c.l.b16 %v1016
        %v1056 = vunpack.c.l.b16 %v1017
        %v1057 = vunpack.c.l.b16 %v1018
        %v1058 = vunpack.c.l.b16 %v1019
        %v1059 = vunpack.c.l.b16 %v1020
        %v1060 = vunpack.c.l.b16 %v1021
        %v1061 = vunpack.c.l.b16 %v1022
        %v1062 = vpack.c.b16 %v1047, %v1046
        %v1063 = vpack.c.b16 %v1049, %v1048
        %v1064 = vpack.c.b16 %v1051, %v1050
        %v1065 = vpack.c.b16 %v1053, %v1052
        %v1066 = vpack.c.b16 %v1055, %v1054
        %v1067 = vpack.c.b16 %v1057, %v1056
        %v1068 = vpack.c.b16 %v1059, %v1058
        %v1069 = vpack.c.b16 %v1061, %v1060
        %1078 = vmatprep.subr.bf16.mxu0 0
        %1079 = vmatpush1.bf16.msra.mxu0 %v1069
        %1080 = vmatprep.subr.bf16.mxu0 0
        %1081 = vmatpush1.bf16.msra.mxu0 %v1068
        %1082 = vmatprep.subr.bf16.mxu0 0
        %1083 = vmatpush1.bf16.msra.mxu0 %v1067
        %1084 = vmatprep.subr.bf16.mxu0 0
        %1085 = vmatpush1.bf16.msra.mxu0 %v1066
        %1086 = vmatprep.subr.bf16.mxu0 0
        %1087 = vmatpush1.bf16.msra.mxu0 %v1065
        %1088 = vmatprep.subr.bf16.mxu0 0
        %1089 = vmatpush1.bf16.msra.mxu0 %v1064
        %1090 = vmatprep.subr.bf16.mxu0 0
        %1091 = vmatpush1.bf16.msra.mxu0 %v1063
        %1092 = vmatprep.subr.bf16.mxu0 0
        %1093 = vmatpush1.bf16.msra.mxu0 %v1062
        %1094 = vmatprep.subr.bf16.mxu0 0
        %1095 = vmatpush2.bf16.msra.mxu0 0
        %1096 = vmatprep.subr.bf16.mxu0 0
        %1097 = vmatpush2.bf16.msra.mxu0 0
        %1098 = vmatprep.subr.bf16.mxu0 0
        %1099 = vmatpush2.bf16.msra.mxu0 0
        %1100 = vmatprep.subr.bf16.mxu0 0
        %1101 = vmatpush2.bf16.msra.mxu0 0
        %1102 = vmatprep.subr.bf16.mxu0 0
        %1103 = vmatpush2.bf16.msra.mxu0 0
        %1104 = vmatprep.subr.bf16.mxu0 0
        %1105 = vmatpush2.bf16.msra.mxu0 0
        %1106 = vmatprep.subr.bf16.mxu0 0
        %1107 = vmatpush2.bf16.msra.mxu0 0
        %1108 = vmatprep.subr.bf16.mxu0 0
        %1109 = vmatpush2.bf16.msra.mxu0 0
        %1110 = vmatprep.mubr.bf16.mxu0 0
        %1111 = vmatmul.mubr.bf16.gmra.mxu0 %v1006
        %v1112 = vpop.f32.mrf.mxu0
        %v1113 = vadd.f32 %v1028, %v1112
        %v1114 = vpop.f32.mrf.mxu0
        %v1115 = vpop.f32.mrf.mxu0
        %v1116 = vpop.f32.mrf.mxu0
        %1117 = vdwg.mxu0
        %vm1118 = vcmp.gt.f32.partialorder %v1113, 0.0
        %v1119 = vmul.f32 %v1113, 0.01
        %v1120 = vsel %vm1118, %v1113, %v1119
        %v1121 = vpack.c.bf16 %v1120, %v1120
        %v1122 = vunpack.c.l.bf16 %v1121
        %1123 = vst [vmem:[%s766] sm:$0xff] %v1122
        %v1124 = vld [vmem:[%s662] sm:$0xf]
        %v1125 = vld [vmem:[#allocation10] sm:$0xf]
        %v1126 = vld [vmem:[#allocation10 + $0x4] sm:$0xf]
        %v1127 = vld [vmem:[#allocation10 + $0x8] sm:$0xf]
        %v1128 = vld [vmem:[#allocation10 + $0xc] sm:$0xf]
        %v1129 = vld [vmem:[#allocation10 + $0x10] sm:$0xf]
        %v1130 = vld [vmem:[#allocation10 + $0x14] sm:$0xf]
        %v1131 = vld [vmem:[#allocation10 + $0x18] sm:$0xf]
        %v1132 = vld [vmem:[#allocation10 + $0x1c] sm:$0xf]
        %v1133 = vld [vmem:[#allocation10 + $0x20] sm:$0xf]
        %v1134 = vld [vmem:[#allocation10 + $0x24] sm:$0xf]
        %v1135 = vld [vmem:[#allocation10 + $0x28] sm:$0xf]
        %v1136 = vld [vmem:[#allocation10 + $0x2c] sm:$0xf]
        %v1137 = vld [vmem:[#allocation10 + $0x30] sm:$0xf]
        %v1138 = vld [vmem:[#allocation10 + $0x34] sm:$0xf]
        %v1139 = vld [vmem:[#allocation10 + $0x38] sm:$0xf]
        %v1140 = vld [vmem:[#allocation10 + $0x3c] sm:$0xf]
        %v1141 = vld [vmem:[%s9] sm:$0x1]
        %v1143 = vlaneseq
        %v1144 = vshrl.u32 %v1143, 7
        %v1145 = vsub.s32 0, %v1144
        %v1146 = vrot.slane %v1141, %v1145
        %v1164 = vunpack.c.l.b16 %v1125
        %v1165 = vunpack.c.l.b16 %v1126
        %v1166 = vunpack.c.l.b16 %v1127
        %v1167 = vunpack.c.l.b16 %v1128
        %v1168 = vunpack.c.l.b16 %v1129
        %v1169 = vunpack.c.l.b16 %v1130
        %v1170 = vunpack.c.l.b16 %v1131
        %v1171 = vunpack.c.l.b16 %v1132
        %v1172 = vunpack.c.l.b16 %v1133
        %v1173 = vunpack.c.l.b16 %v1134
        %v1174 = vunpack.c.l.b16 %v1135
        %v1175 = vunpack.c.l.b16 %v1136
        %v1176 = vunpack.c.l.b16 %v1137
        %v1177 = vunpack.c.l.b16 %v1138
        %v1178 = vunpack.c.l.b16 %v1139
        %v1179 = vunpack.c.l.b16 %v1140
        %v1180 = vpack.c.b16 %v1165, %v1164
        %v1181 = vpack.c.b16 %v1167, %v1166
        %v1182 = vpack.c.b16 %v1169, %v1168
        %v1183 = vpack.c.b16 %v1171, %v1170
        %v1184 = vpack.c.b16 %v1173, %v1172
        %v1185 = vpack.c.b16 %v1175, %v1174
        %v1186 = vpack.c.b16 %v1177, %v1176
        %v1187 = vpack.c.b16 %v1179, %v1178
        %1196 = vmatprep.subr.bf16.mxu0 0
        %1197 = vmatpush1.bf16.msra.mxu0 %v1187
        %1198 = vmatprep.subr.bf16.mxu0 0
        %1199 = vmatpush1.bf16.msra.mxu0 %v1186
        %1200 = vmatprep.subr.bf16.mxu0 0
        %1201 = vmatpush1.bf16.msra.mxu0 %v1185
        %1202 = vmatprep.subr.bf16.mxu0 0
        %1203 = vmatpush1.bf16.msra.mxu0 %v1184
        %1204 = vmatprep.subr.bf16.mxu0 0
        %1205 = vmatpush1.bf16.msra.mxu0 %v1183
        %1206 = vmatprep.subr.bf16.mxu0 0
        %1207 = vmatpush1.bf16.msra.mxu0 %v1182
        %1208 = vmatprep.subr.bf16.mxu0 0
        %1209 = vmatpush1.bf16.msra.mxu0 %v1181
        %1210 = vmatprep.subr.bf16.mxu0 0
        %1211 = vmatpush1.bf16.msra.mxu0 %v1180
        %1212 = vmatprep.subr.bf16.mxu0 0
        %1213 = vmatpush2.bf16.msra.mxu0 0
        %1214 = vmatprep.subr.bf16.mxu0 0
        %1215 = vmatpush2.bf16.msra.mxu0 0
        %1216 = vmatprep.subr.bf16.mxu0 0
        %1217 = vmatpush2.bf16.msra.mxu0 0
        %1218 = vmatprep.subr.bf16.mxu0 0
        %1219 = vmatpush2.bf16.msra.mxu0 0
        %1220 = vmatprep.subr.bf16.mxu0 0
        %1221 = vmatpush2.bf16.msra.mxu0 0
        %1222 = vmatprep.subr.bf16.mxu0 0
        %1223 = vmatpush2.bf16.msra.mxu0 0
        %1224 = vmatprep.subr.bf16.mxu0 0
        %1225 = vmatpush2.bf16.msra.mxu0 0
        %1226 = vmatprep.subr.bf16.mxu0 0
        %1227 = vmatpush2.bf16.msra.mxu0 0
        %1228 = vmatprep.mubr.bf16.mxu0 0
        %1229 = vmatmul.mubr.bf16.gmra.mxu0 %v1124
        %v1230 = vpop.f32.mrf.mxu0
        %v1231 = vadd.f32 %v1146, %v1230
        %v1232 = vpop.f32.mrf.mxu0
        %v1233 = vpop.f32.mrf.mxu0
        %v1234 = vpop.f32.mrf.mxu0
        %1235 = vdwg.mxu0
        %vm1236 = vcmp.gt.f32.partialorder %v1231, 0.0
        %v1237 = vmul.f32 %v1231, 0.01
        %v1238 = vsel %vm1236, %v1231, %v1237
        %v1239 = vpack.c.bf16 %v1238, %v1238
        %v1240 = vld [vmem:[#allocation12] sm:$0xf]
        %v1241 = vld [vmem:[#allocation12 + $0x4] sm:$0xf]
        %v1242 = vld [vmem:[#allocation12 + $0x8] sm:$0xf]
        %v1243 = vld [vmem:[#allocation12 + $0xc] sm:$0xf]
        %v1244 = vld [vmem:[#allocation12 + $0x10] sm:$0xf]
        %v1245 = vld [vmem:[#allocation12 + $0x14] sm:$0xf]
        %v1246 = vld [vmem:[#allocation12 + $0x18] sm:$0xf]
        %v1247 = vld [vmem:[#allocation12 + $0x1c] sm:$0xf]
        %v1248 = vld [vmem:[#allocation12 + $0x20] sm:$0xf]
        %v1249 = vld [vmem:[#allocation12 + $0x24] sm:$0xf]
        %v1250 = vld [vmem:[#allocation12 + $0x28] sm:$0xf]
        %v1251 = vld [vmem:[#allocation12 + $0x2c] sm:$0xf]
        %v1252 = vld [vmem:[#allocation12 + $0x30] sm:$0xf]
        %v1253 = vld [vmem:[#allocation12 + $0x34] sm:$0xf]
        %v1254 = vld [vmem:[#allocation12 + $0x38] sm:$0xf]
        %v1255 = vld [vmem:[#allocation12 + $0x3c] sm:$0xf]
        %v1256 = vld [vmem:[%s11] sm:$0x1]
        %v1258 = vlaneseq
        %v1259 = vshrl.u32 %v1258, 7
        %v1260 = vsub.s32 0, %v1259
        %v1261 = vrot.slane %v1256, %v1260
        %v1279 = vunpack.c.l.b16 %v1240
        %v1280 = vunpack.c.l.b16 %v1241
        %v1281 = vunpack.c.l.b16 %v1242
        %v1282 = vunpack.c.l.b16 %v1243
        %v1283 = vunpack.c.l.b16 %v1244
        %v1284 = vunpack.c.l.b16 %v1245
        %v1285 = vunpack.c.l.b16 %v1246
        %v1286 = vunpack.c.l.b16 %v1247
        %v1287 = vunpack.c.l.b16 %v1248
        %v1288 = vunpack.c.l.b16 %v1249
        %v1289 = vunpack.c.l.b16 %v1250
        %v1290 = vunpack.c.l.b16 %v1251
        %v1291 = vunpack.c.l.b16 %v1252
        %v1292 = vunpack.c.l.b16 %v1253
        %v1293 = vunpack.c.l.b16 %v1254
        %v1294 = vunpack.c.l.b16 %v1255
        %v1295 = vpack.c.b16 %v1280, %v1279
        %v1296 = vpack.c.b16 %v1282, %v1281
        %v1297 = vpack.c.b16 %v1284, %v1283
        %v1298 = vpack.c.b16 %v1286, %v1285
        %v1299 = vpack.c.b16 %v1288, %v1287
        %v1300 = vpack.c.b16 %v1290, %v1289
        %v1301 = vpack.c.b16 %v1292, %v1291
        %v1302 = vpack.c.b16 %v1294, %v1293
        %1311 = vmatprep.subr.bf16.mxu0 0
        %1312 = vmatpush1.bf16.msra.mxu0 %v1302
        %1313 = vmatprep.subr.bf16.mxu0 0
        %1314 = vmatpush1.bf16.msra.mxu0 %v1301
        %1315 = vmatprep.subr.bf16.mxu0 0
        %1316 = vmatpush1.bf16.msra.mxu0 %v1300
        %1317 = vmatprep.subr.bf16.mxu0 0
        %1318 = vmatpush1.bf16.msra.mxu0 %v1299
        %1319 = vmatprep.subr.bf16.mxu0 0
        %1320 = vmatpush1.bf16.msra.mxu0 %v1298
        %1321 = vmatprep.subr.bf16.mxu0 0
        %1322 = vmatpush1.bf16.msra.mxu0 %v1297
        %1323 = vmatprep.subr.bf16.mxu0 0
        %1324 = vmatpush1.bf16.msra.mxu0 %v1296
        %1325 = vmatprep.subr.bf16.mxu0 0
        %1326 = vmatpush1.bf16.msra.mxu0 %v1295
        %1327 = vmatprep.subr.bf16.mxu0 0
        %1328 = vmatpush2.bf16.msra.mxu0 0
        %1329 = vmatprep.subr.bf16.mxu0 0
        %1330 = vmatpush2.bf16.msra.mxu0 0
        %1331 = vmatprep.subr.bf16.mxu0 0
        %1332 = vmatpush2.bf16.msra.mxu0 0
        %1333 = vmatprep.subr.bf16.mxu0 0
        %1334 = vmatpush2.bf16.msra.mxu0 0
        %1335 = vmatprep.subr.bf16.mxu0 0
        %1336 = vmatpush2.bf16.msra.mxu0 0
        %1337 = vmatprep.subr.bf16.mxu0 0
        %1338 = vmatpush2.bf16.msra.mxu0 0
        %1339 = vmatprep.subr.bf16.mxu0 0
        %1340 = vmatpush2.bf16.msra.mxu0 0
        %1341 = vmatprep.subr.bf16.mxu0 0
        %1342 = vmatpush2.bf16.msra.mxu0 0
        %1343 = vmatprep.mubr.bf16.mxu0 0
        %1344 = vmatmul.mubr.bf16.gmra.mxu0 %v1239
        %v1345 = vpop.f32.mrf.mxu0
        %v1346 = vadd.f32 %v1261, %v1345
        %v1347 = vpop.f32.mrf.mxu0
        %v1348 = vpop.f32.mrf.mxu0
        %v1349 = vpop.f32.mrf.mxu0
        %1350 = vdwg.mxu0
        %vm1351 = vcmp.gt.f32.partialorder %v1346, 0.0
        %v1352 = vmul.f32 %v1346, 0.01
        %v1353 = vsel %vm1351, %v1346, %v1352
        %v1354 = vpack.c.bf16 %v1353, %v1353
        %v1355 = vunpack.c.l.bf16 %v1354
        %1356 = vst [vmem:[%s770] sm:$0xff] %v1355
        %v1357 = vld [vmem:[#allocation13] sm:$0xf]
        %v1358 = vld [vmem:[#allocation13 + $0x4] sm:$0xf]
        %v1359 = vld [vmem:[#allocation13 + $0x8] sm:$0xf]
        %v1360 = vld [vmem:[#allocation13 + $0xc] sm:$0xf]
        %v1361 = vld [vmem:[#allocation13 + $0x10] sm:$0xf]
        %v1362 = vld [vmem:[#allocation13 + $0x14] sm:$0xf]
        %v1363 = vld [vmem:[#allocation13 + $0x18] sm:$0xf]
        %v1364 = vld [vmem:[#allocation13 + $0x1c] sm:$0xf]
        %v1365 = vld [vmem:[#allocation13 + $0x20] sm:$0xf]
        %v1366 = vld [vmem:[#allocation13 + $0x24] sm:$0xf]
        %v1367 = vld [vmem:[#allocation13 + $0x28] sm:$0xf]
        %v1368 = vld [vmem:[#allocation13 + $0x2c] sm:$0xf]
        %v1369 = vld [vmem:[#allocation13 + $0x30] sm:$0xf]
        %v1370 = vld [vmem:[#allocation13 + $0x34] sm:$0xf]
        %v1371 = vld [vmem:[#allocation13 + $0x38] sm:$0xf]
        %v1372 = vld [vmem:[#allocation13 + $0x3c] sm:$0xf]
        %v1373 = vld [vmem:[#allocation15] sm:$0x1]
        %v1375 = vlaneseq
        %v1376 = vshrl.u32 %v1375, 7
        %v1377 = vsub.s32 0, %v1376
        %v1378 = vrot.slane %v1373, %v1377
        %v1396 = vunpack.c.l.b16 %v1357
        %v1397 = vunpack.c.l.b16 %v1358
        %v1398 = vunpack.c.l.b16 %v1359
        %v1399 = vunpack.c.l.b16 %v1360
        %v1400 = vunpack.c.l.b16 %v1361
        %v1401 = vunpack.c.l.b16 %v1362
        %v1402 = vunpack.c.l.b16 %v1363
        %v1403 = vunpack.c.l.b16 %v1364
        %v1404 = vunpack.c.l.b16 %v1365
        %v1405 = vunpack.c.l.b16 %v1366
        %v1406 = vunpack.c.l.b16 %v1367
        %v1407 = vunpack.c.l.b16 %v1368
        %v1408 = vunpack.c.l.b16 %v1369
        %v1409 = vunpack.c.l.b16 %v1370
        %v1410 = vunpack.c.l.b16 %v1371
        %v1411 = vunpack.c.l.b16 %v1372
        %v1412 = vpack.c.b16 %v1397, %v1396
        %v1413 = vpack.c.b16 %v1399, %v1398
        %v1414 = vpack.c.b16 %v1401, %v1400
        %v1415 = vpack.c.b16 %v1403, %v1402
        %v1416 = vpack.c.b16 %v1405, %v1404
        %v1417 = vpack.c.b16 %v1407, %v1406
        %v1418 = vpack.c.b16 %v1409, %v1408
        %v1419 = vpack.c.b16 %v1411, %v1410
        %1428 = vmatprep.subr.bf16.mxu0 0
        %1429 = vmatpush1.bf16.msra.mxu0 %v1419
        %1430 = vmatprep.subr.bf16.mxu0 0
        %1431 = vmatpush1.bf16.msra.mxu0 %v1418
        %1432 = vmatprep.subr.bf16.mxu0 0
        %1433 = vmatpush1.bf16.msra.mxu0 %v1417
        %1434 = vmatprep.subr.bf16.mxu0 0
        %1435 = vmatpush1.bf16.msra.mxu0 %v1416
        %1436 = vmatprep.subr.bf16.mxu0 0
        %1437 = vmatpush1.bf16.msra.mxu0 %v1415
        %1438 = vmatprep.subr.bf16.mxu0 0
        %1439 = vmatpush1.bf16.msra.mxu0 %v1414
        %1440 = vmatprep.subr.bf16.mxu0 0
        %1441 = vmatpush1.bf16.msra.mxu0 %v1413
        %1442 = vmatprep.subr.bf16.mxu0 0
        %1443 = vmatpush1.bf16.msra.mxu0 %v1412
        %1444 = vmatprep.subr.bf16.mxu0 0
        %1445 = vmatpush2.bf16.msra.mxu0 0
        %1446 = vmatprep.subr.bf16.mxu0 0
        %1447 = vmatpush2.bf16.msra.mxu0 0
        %1448 = vmatprep.subr.bf16.mxu0 0
        %1449 = vmatpush2.bf16.msra.mxu0 0
        %1450 = vmatprep.subr.bf16.mxu0 0
        %1451 = vmatpush2.bf16.msra.mxu0 0
        %1452 = vmatprep.subr.bf16.mxu0 0
        %1453 = vmatpush2.bf16.msra.mxu0 0
        %1454 = vmatprep.subr.bf16.mxu0 0
        %1455 = vmatpush2.bf16.msra.mxu0 0
        %1456 = vmatprep.subr.bf16.mxu0 0
        %1457 = vmatpush2.bf16.msra.mxu0 0
        %1458 = vmatprep.subr.bf16.mxu0 0
        %1459 = vmatpush2.bf16.msra.mxu0 0
        %1460 = vmatprep.mubr.bf16.mxu0 0
        %1461 = vmatmul.mubr.bf16.gmra.mxu0 %v1354
        %v1462 = vpop.f32.mrf.mxu0
        %v1463 = vadd.f32 %v1378, %v1462
        %v1464 = vpop.f32.mrf.mxu0
        %v1465 = vpop.f32.mrf.mxu0
        %v1466 = vpop.f32.mrf.mxu0
        %1467 = vdwg.mxu0
        %vm1468 = vcmp.gt.f32.partialorder %v1463, 0.0
        %v1469 = vmul.f32 %v1463, 0.01
        %v1470 = vsel %vm1468, %v1463, %v1469
        %v1471 = vpack.c.bf16 %v1470, %v1470
        %v1472 = vld [vmem:[#allocation16] sm:$0xf]
        %v1473 = vld [vmem:[#allocation16 + $0x4] sm:$0xf]
        %v1474 = vld [vmem:[#allocation16 + $0x8] sm:$0xf]
        %v1475 = vld [vmem:[#allocation16 + $0xc] sm:$0xf]
        %v1476 = vld [vmem:[#allocation16 + $0x10] sm:$0xf]
        %v1477 = vld [vmem:[#allocation16 + $0x14] sm:$0xf]
        %v1478 = vld [vmem:[#allocation16 + $0x18] sm:$0xf]
        %v1479 = vld [vmem:[#allocation16 + $0x1c] sm:$0xf]
        %v1480 = vld [vmem:[#allocation16 + $0x20] sm:$0xf]
        %v1481 = vld [vmem:[#allocation16 + $0x24] sm:$0xf]
        %v1482 = vld [vmem:[#allocation16 + $0x28] sm:$0xf]
        %v1483 = vld [vmem:[#allocation16 + $0x2c] sm:$0xf]
        %v1484 = vld [vmem:[#allocation16 + $0x30] sm:$0xf]
        %v1485 = vld [vmem:[#allocation16 + $0x34] sm:$0xf]
        %v1486 = vld [vmem:[#allocation16 + $0x38] sm:$0xf]
        %v1487 = vld [vmem:[#allocation16 + $0x3c] sm:$0xf]
        %v1488 = vld [vmem:[#allocation18] sm:$0x1]
        %v1490 = vlaneseq
        %v1491 = vshrl.u32 %v1490, 7
        %v1492 = vsub.s32 0, %v1491
        %v1493 = vrot.slane %v1488, %v1492
        %v1511 = vunpack.c.l.b16 %v1472
        %v1512 = vunpack.c.l.b16 %v1473
        %v1513 = vunpack.c.l.b16 %v1474
        %v1514 = vunpack.c.l.b16 %v1475
        %v1515 = vunpack.c.l.b16 %v1476
        %v1516 = vunpack.c.l.b16 %v1477
        %v1517 = vunpack.c.l.b16 %v1478
        %v1518 = vunpack.c.l.b16 %v1479
        %v1519 = vunpack.c.l.b16 %v1480
        %v1520 = vunpack.c.l.b16 %v1481
        %v1521 = vunpack.c.l.b16 %v1482
        %v1522 = vunpack.c.l.b16 %v1483
        %v1523 = vunpack.c.l.b16 %v1484
        %v1524 = vunpack.c.l.b16 %v1485
        %v1525 = vunpack.c.l.b16 %v1486
        %v1526 = vunpack.c.l.b16 %v1487
        %v1527 = vpack.c.b16 %v1512, %v1511
        %v1528 = vpack.c.b16 %v1514, %v1513
        %v1529 = vpack.c.b16 %v1516, %v1515
        %v1530 = vpack.c.b16 %v1518, %v1517
        %v1531 = vpack.c.b16 %v1520, %v1519
        %v1532 = vpack.c.b16 %v1522, %v1521
        %v1533 = vpack.c.b16 %v1524, %v1523
        %v1534 = vpack.c.b16 %v1526, %v1525
        %1543 = vmatprep.subr.bf16.mxu0 0
        %1544 = vmatpush1.bf16.msra.mxu0 %v1534
        %1545 = vmatprep.subr.bf16.mxu0 0
        %1546 = vmatpush1.bf16.msra.mxu0 %v1533
        %1547 = vmatprep.subr.bf16.mxu0 0
        %1548 = vmatpush1.bf16.msra.mxu0 %v1532
        %1549 = vmatprep.subr.bf16.mxu0 0
        %1550 = vmatpush1.bf16.msra.mxu0 %v1531
        %1551 = vmatprep.subr.bf16.mxu0 0
        %1552 = vmatpush1.bf16.msra.mxu0 %v1530
        %1553 = vmatprep.subr.bf16.mxu0 0
        %1554 = vmatpush1.bf16.msra.mxu0 %v1529
        %1555 = vmatprep.subr.bf16.mxu0 0
        %1556 = vmatpush1.bf16.msra.mxu0 %v1528
        %1557 = vmatprep.subr.bf16.mxu0 0
        %1558 = vmatpush1.bf16.msra.mxu0 %v1527
        %1559 = vmatprep.subr.bf16.mxu0 0
        %1560 = vmatpush2.bf16.msra.mxu0 0
        %1561 = vmatprep.subr.bf16.mxu0 0
        %1562 = vmatpush2.bf16.msra.mxu0 0
        %1563 = vmatprep.subr.bf16.mxu0 0
        %1564 = vmatpush2.bf16.msra.mxu0 0
        %1565 = vmatprep.subr.bf16.mxu0 0
        %1566 = vmatpush2.bf16.msra.mxu0 0
        %1567 = vmatprep.subr.bf16.mxu0 0
        %1568 = vmatpush2.bf16.msra.mxu0 0
        %1569 = vmatprep.subr.bf16.mxu0 0
        %1570 = vmatpush2.bf16.msra.mxu0 0
        %1571 = vmatprep.subr.bf16.mxu0 0
        %1572 = vmatpush2.bf16.msra.mxu0 0
        %1573 = vmatprep.subr.bf16.mxu0 0
        %1574 = vmatpush2.bf16.msra.mxu0 0
        %1575 = vmatprep.mubr.bf16.mxu0 0
        %1576 = vmatmul.mubr.bf16.gmra.mxu0 %v1471
        %v1577 = vpop.f32.mrf.mxu0
        %v1578 = vadd.f32 %v1493, %v1577
        %v1579 = vpop.f32.mrf.mxu0
        %v1580 = vpop.f32.mrf.mxu0
        %v1581 = vpop.f32.mrf.mxu0
        %1582 = vdwg.mxu0
        %1583 = vst [vmem:[%s774] sm:$0xff] %v1578
        %p1584 = scmp.lt.s32.totalorder %s40, 2
        %s1585 = scalar_select %p1584, %s40, 2
        %s1586 = smul.addr %s1585, 8
        %s1587 = scalar_lea.vmem %s16, %s1586
        %p1588 = scmp.lt.s32.totalorder %s40, 2
        %s1589 = scalar_select %p1588, %s40, 2
        %s1590 = smul.addr %s1589, 8
        %s1591 = scalar_lea.vmem %s17, %s1590
        %p1592 = scmp.lt.s32.totalorder %s40, 2
        %s1593 = scalar_select %p1592, %s40, 2
        %s1594 = smul.addr %s1593, 8
        %s1595 = scalar_lea.vmem %s18, %s1594
        // Predicated region
        $region129: #{c2ae_forward_train.1} parent=83 // pred_check
          %p1596 = pneg %p404
        $region130: #{c2ae_forward_train.1} parent=83 // pred_check_branch
          %1598 = sbr.rel (%p1596) target = $region132
        $region131: #{c2ae_forward_train.1} parent=83 // pred_region
          _
        $region132: #{c2ae_forward_train.1} parent=83 // pred_fallthru
          _
        // Predicated region
        $region133: #{c2ae_forward_train.1} parent=83 // pred_check
          %p1599 = pneg %p430
        $region134: #{c2ae_forward_train.1} parent=83 // pred_check_branch
          %1601 = sbr.rel (%p1599) target = $region136
        $region135: #{c2ae_forward_train.1} parent=83 // pred_region
          _
        $region136: #{c2ae_forward_train.1} parent=83 // pred_fallthru
          _
        // Predicated region
        $region137: #{c2ae_forward_train.1} parent=83 // pred_check
          %p1602 = pneg %p456
        $region138: #{c2ae_forward_train.1} parent=83 // pred_check_branch
          %1604 = sbr.rel (%p1602) target = $region140
        $region139: #{c2ae_forward_train.1} parent=83 // pred_region
          _
        $region140: #{c2ae_forward_train.1} parent=83 // pred_fallthru
          _
      $region84: #{c2ae_forward_train.1} parent=5 // pred_fallthru
        _
      %p1605 = scmp.le.s32.totalorder 2, %s35
      // Predicated region
      $region141: #{c2ae_forward_train.1} parent=5 // pred_check
        %p1606 = pneg %p1605
      $region142: #{c2ae_forward_train.1} parent=5 // pred_check_branch
        %1608 = sbr.rel (%p1606) target = $region144
      $region143: #{c2ae_forward_train.1} parent=5 // pred_region
        %s1609 = ssub.s32 %s35, 2
        // Predicated region
        $region145: #{c2ae_forward_train.1} parent=143 // pred_check
          %p1610 = pneg %p410
        $region146: #{c2ae_forward_train.1} parent=143 // pred_check_branch
          %1612 = sbr.rel (%p1610) target = $region148
        $region147: #{c2ae_forward_train.1} parent=143 // pred_region
          %p1613 = scmp.lt.s32.totalorder %s41, 2
          %s1614 = scalar_select %p1613, %s41, 2
          %s1615 = smul.addr %s1614, 8
          %s1616 = scalar_lea.vmem %s16, %s1615
        $region148: #{c2ae_forward_train.1} parent=143 // pred_fallthru
          _
        // Predicated region
        $region149: #{c2ae_forward_train.1} parent=143 // pred_check
          %p1617 = pneg %p436
        $region150: #{c2ae_forward_train.1} parent=143 // pred_check_branch
          %1619 = sbr.rel (%p1617) target = $region152
        $region151: #{c2ae_forward_train.1} parent=143 // pred_region
          %p1620 = scmp.lt.s32.totalorder %s41, 2
          %s1621 = scalar_select %p1620, %s41, 2
          %s1622 = smul.addr %s1621, 8
          %s1623 = scalar_lea.vmem %s17, %s1622
        $region152: #{c2ae_forward_train.1} parent=143 // pred_fallthru
          _
        // Predicated region
        $region153: #{c2ae_forward_train.1} parent=143 // pred_check
          %p1624 = pneg %p462
        $region154: #{c2ae_forward_train.1} parent=143 // pred_check_branch
          %1626 = sbr.rel (%p1624) target = $region156
        $region155: #{c2ae_forward_train.1} parent=143 // pred_region
          %p1627 = scmp.lt.s32.totalorder %s41, 2
          %s1628 = scalar_select %p1627, %s41, 2
          %s1629 = smul.addr %s1628, 8
          %s1630 = scalar_lea.vmem %s18, %s1629
        $region156: #{c2ae_forward_train.1} parent=143 // pred_fallthru
          _
      $region144: #{c2ae_forward_train.1} parent=5 // pred_fallthru
        _
    $region6: #{c2ae_forward_train.1} parent=1 // loop_footer
      %s39 = sadd.s32 1, %s35
    $region7: #{c2ae_forward_train.1} parent=1 // loop_footer_branch
      %34 = sbr.rel target = $region3
    $region8: #{c2ae_forward_train.1} parent=1 // loop_exit
      _
    %1631 = vsyncpa [#allocation3], 1
    %s1632 = scalar_lea.sflag [#allocation3], 1
    %1633 = vsyncpa %s1632, 1
    %1634 = vsyncpa [#allocation5], 1
    %s1635 = scalar_lea.sflag [#allocation5], 1
    %1636 = vsyncpa %s1635, 1
    %1637 = vsyncpa [#allocation8], 1
    %1638 = vsyncpa [#allocation11], 1
    %1639 = vsyncpa [#allocation14], 1
    %1640 = vsyncpa [#allocation17], 1

</llo_original>
